<compile_context>
chip_gen: v6e
topology: v6e:2x2x1
jax: 0.10.0
libtpu: 0.0.40
codegen_flags: <defaults>
</compile_context>

<pallas_src>
import math
import functools

import jax
import jax.numpy as jnp
from jax.experimental import pallas as pl
from jax.experimental.pallas import tpu as pltpu

EPS = 1e-6


# --------------------------- in-kernel helpers --------------------------------


def _layer_norm_rows(x, a, b):
    """Annotated-transformer LayerNorm on [M, D] rows (unbiased std, eps on std)."""
    d = x.shape[-1]
    mean = jnp.mean(x, axis=-1, keepdims=True)
    var = jnp.sum((x - mean) ** 2, axis=-1, keepdims=True) / (d - 1)
    inv = pl.reciprocal(jnp.sqrt(var) + EPS, approx=True)
    return a * (x - mean) * inv + b


def _softmax_rows(s):
    s = s - jnp.max(s, axis=-1, keepdims=True)
    p = jnp.exp(s)
    return p * pl.reciprocal(jnp.sum(p, axis=-1, keepdims=True), approx=True)


def _bf16(x):
    return x.astype(jnp.bfloat16)


# --------------------------- Pallas kernels -----------------------------------


def _self_attn_kernel(x_ref, wqkv_ref, bqkv_ref, wo_ref, bo_ref,
                      ln_a_ref, ln_b_ref, mask_ref, o_ref, *, H, scale):
    x = x_ref[0]                                   # [Lt, D] fp32
    D = x.shape[-1]
    dk = D // H

    nx = _layer_norm_rows(x, ln_a_ref[...], ln_b_ref[...])

    # fused QKV projection (bf16 operands, fp32 accumulation)
    qkv = jnp.dot(_bf16(nx), wqkv_ref[...],
                  preferred_element_type=jnp.float32) + bqkv_ref[...]   # [Lt, 3D]

    mask = mask_ref[0]                             # [Lt, Lt]
    heads = []
    for h in range(H):                             # static loop, static lane slices
        q = qkv[:, h * dk:(h + 1) * dk]
        k = qkv[:, D + h * dk:D + (h + 1) * dk]
        v = qkv[:, 2 * D + h * dk:2 * D + (h + 1) * dk]
        s = jax.lax.dot_general(_bf16(q), _bf16(k), (((1,), (1,)), ((), ())),
                                preferred_element_type=jnp.float32) * scale
        s = jnp.where(mask > 0.0, s, -1e9)
        p = _softmax_rows(s)
        heads.append(jnp.dot(_bf16(p), _bf16(v),
                             preferred_element_type=jnp.float32))
    attn = jnp.concatenate(heads, axis=-1)         # [Lt, D] (lane-dense)

    out = jnp.dot(_bf16(attn), wo_ref[...],
                  preferred_element_type=jnp.float32) + bo_ref[...]
    o_ref[0] = out + x                             # fused residual


def _cross_attn_kernel(x_ref, mem_ref, wq_ref, bq_ref, wkv_ref, bkv_ref,
                       wo_ref, bo_ref, ln_a_ref, ln_b_ref, mask_ref, o_ref,
                       *, H, scale):
    x = x_ref[0]                                   # [Lq, D]
    mem = mem_ref[0]                               # [Lk, D]
    D = x.shape[-1]
    dk = D // H

    nx = _layer_norm_rows(x, ln_a_ref[...], ln_b_ref[...])

    q = jnp.dot(_bf16(nx), wq_ref[...],
                preferred_element_type=jnp.float32) + bq_ref[...]       # [Lq, D]
    kv = jnp.dot(_bf16(mem), wkv_ref[...],
                 preferred_element_type=jnp.float32) + bkv_ref[...]     # [Lk, 2D]

    mask = mask_ref[0]                             # [1, Lk] -> broadcasts over rows
    heads = []
    for h in range(H):
        qh = q[:, h * dk:(h + 1) * dk]
        kh = kv[:, h * dk:(h + 1) * dk]
        vh = kv[:, D + h * dk:D + (h + 1) * dk]
        s = jax.lax.dot_general(_bf16(qh), _bf16(kh), (((1,), (1,)), ((), ())),
                                preferred_element_type=jnp.float32) * scale
        s = jnp.where(mask > 0.0, s, -1e9)
        p = _softmax_rows(s)
        heads.append(jnp.dot(_bf16(p), _bf16(vh),
                             preferred_element_type=jnp.float32))
    attn = jnp.concatenate(heads, axis=-1)         # [Lq, D]

    out = jnp.dot(_bf16(attn), wo_ref[...],
                  preferred_element_type=jnp.float32) + bo_ref[...]
    o_ref[0] = out + x                             # fused residual


def _ffn_kernel(x_ref, ln_a_ref, ln_b_ref, w1_ref, b1_ref, w2_ref, b2_ref, o_ref):
    x = x_ref[...]                                 # [TM, D]
    nx = _layer_norm_rows(x, ln_a_ref[...], ln_b_ref[...])
    h = jnp.dot(_bf16(nx), w1_ref[...],
                preferred_element_type=jnp.float32) + b1_ref[...]
    h = jnp.maximum(h, 0.0)                        # ReLU (fp32)
    out = jnp.dot(_bf16(h), w2_ref[...],
                  preferred_element_type=jnp.float32) + b2_ref[...]
    o_ref[...] = out + x                           # fused residual


def _final_ln_kernel(x_ref, a_ref, b_ref, o_ref):
    o_ref[...] = _layer_norm_rows(x_ref[...], a_ref[...], b_ref[...])


# --------------------------- wrappers ------------------------------------------


def _row_tile(M, max_tile=512):
    """Largest row tile <= max_tile that evenly divides M (multiple of 8 if possible)."""
    if M <= max_tile:
        return M
    for tm in range(max_tile, 7, -8):
        if M % tm == 0:
            return tm
    return M


def self_attn_sublayer(x, tgt_mask, p, H):
    B, Lt, D = x.shape
    scale = 1.0 / math.sqrt(D // H)
    kern = functools.partial(_self_attn_kernel, H=H, scale=scale)
    return pl.pallas_call(
        kern,
        out_shape=jax.ShapeDtypeStruct((B, Lt, D), jnp.float32),
        grid=(B,),
        in_specs=[
            pl.BlockSpec((1, Lt, D), lambda b: (b, 0, 0)),       # x
            pl.BlockSpec((D, 3 * D), lambda b: (0, 0)),          # wqkv (bf16)
            pl.BlockSpec((1, 3 * D), lambda b: (0, 0)),          # bqkv
            pl.BlockSpec((D, D), lambda b: (0, 0)),              # wo (bf16)
            pl.BlockSpec((1, D), lambda b: (0, 0)),              # bo
            pl.BlockSpec((1, D), lambda b: (0, 0)),              # ln_a
            pl.BlockSpec((1, D), lambda b: (0, 0)),              # ln_b
            pl.BlockSpec((1, Lt, Lt), lambda b: (b, 0, 0)),      # tgt_mask (compact)
        ],
        out_specs=pl.BlockSpec((1, Lt, D), lambda b: (b, 0, 0)),
        compiler_params=pltpu.CompilerParams(dimension_semantics=("parallel",)),
    )(x, p["wqkv"], p["bqkv"], p["wo"], p["bo"], p["ln_a"], p["ln_b"], tgt_mask)


def cross_attn_sublayer(x, memory, src_mask, p, H):
    B, Lq, D = x.shape
    Lk = memory.shape[1]
    scale = 1.0 / math.sqrt(D // H)
    kern = functools.partial(_cross_attn_kernel, H=H, scale=scale)
    return pl.pallas_call(
        kern,
        out_shape=jax.ShapeDtypeStruct((B, Lq, D), jnp.float32),
        grid=(B,),
        in_specs=[
            pl.BlockSpec((1, Lq, D), lambda b: (b, 0, 0)),       # x
            pl.BlockSpec((1, Lk, D), lambda b: (b, 0, 0)),       # memory
            pl.BlockSpec((D, D), lambda b: (0, 0)),              # wq (bf16)
            pl.BlockSpec((1, D), lambda b: (0, 0)),              # bq
            pl.BlockSpec((D, 2 * D), lambda b: (0, 0)),          # wkv (bf16)
            pl.BlockSpec((1, 2 * D), lambda b: (0, 0)),          # bkv
            pl.BlockSpec((D, D), lambda b: (0, 0)),              # wo (bf16)
            pl.BlockSpec((1, D), lambda b: (0, 0)),              # bo
            pl.BlockSpec((1, D), lambda b: (0, 0)),              # ln_a
            pl.BlockSpec((1, D), lambda b: (0, 0)),              # ln_b
            pl.BlockSpec((1, 1, Lk), lambda b: (b, 0, 0)),       # src_mask [B,1,Ls]
        ],
        out_specs=pl.BlockSpec((1, Lq, D), lambda b: (b, 0, 0)),
        compiler_params=pltpu.CompilerParams(dimension_semantics=("parallel",)),
    )(x, memory, p["wq"], p["bq"], p["wkv"], p["bkv"], p["wo"], p["bo"],
      p["ln_a"], p["ln_b"], src_mask)


def ffn_sublayer(x, p):
    B, L, D = x.shape
    Dff = p["w1"].shape[1]
    M = B * L
    TM = _row_tile(M)
    x2 = x.reshape(M, D)
    out = pl.pallas_call(
        _ffn_kernel,
        out_shape=jax.ShapeDtypeStruct((M, D), jnp.float32),
        grid=(M // TM,),
        in_specs=[
            pl.BlockSpec((TM, D), lambda i: (i, 0)),             # x rows
            pl.BlockSpec((1, D), lambda i: (0, 0)),              # ln_a
            pl.BlockSpec((1, D), lambda i: (0, 0)),              # ln_b
            pl.BlockSpec((D, Dff), lambda i: (0, 0)),            # w1 (bf16)
            pl.BlockSpec((1, Dff), lambda i: (0, 0)),            # b1
            pl.BlockSpec((Dff, D), lambda i: (0, 0)),            # w2 (bf16)
            pl.BlockSpec((1, D), lambda i: (0, 0)),              # b2
        ],
        out_specs=pl.BlockSpec((TM, D), lambda i: (i, 0)),
        compiler_params=pltpu.CompilerParams(dimension_semantics=("parallel",)),
    )(x2, p["ln_a"], p["ln_b"], p["w1"], p["b1"], p["w2"], p["b2"])
    return out.reshape(B, L, D)


def layer_norm(x, a, b):
    B, L, D = x.shape
    M = B * L
    TM = _row_tile(M)
    out = pl.pallas_call(
        _final_ln_kernel,
        out_shape=jax.ShapeDtypeStruct((M, D), jnp.float32),
        grid=(M // TM,),
        in_specs=[
            pl.BlockSpec((TM, D), lambda i: (i, 0)),
            pl.BlockSpec((1, D), lambda i: (0, 0)),
            pl.BlockSpec((1, D), lambda i: (0, 0)),
        ],
        out_specs=pl.BlockSpec((TM, D), lambda i: (i, 0)),
        compiler_params=pltpu.CompilerParams(dimension_semantics=("parallel",)),
    )(x.reshape(M, D), a, b)
    return out.reshape(B, L, D)


# --------------------------- decoder forward ------------------------------------


def decoder_forward(x, memory, src_mask, tgt_mask, params, H):
    for lp in params["layers"]:
        x = self_attn_sublayer(x, tgt_mask, lp["self_attn"], H)
        x = cross_attn_sublayer(x, memory, src_mask, lp["src_attn"], H)
        x = ffn_sublayer(x, lp["ff"])
    return layer_norm(x, params["final_ln_a"], params["final_ln_b"])


# --------------------------- deterministic params --------------------------------


def _init_linear(key, din, dout):
    k1, k2 = jax.random.split(key)
    w = jax.random.normal(k1, (din, dout), jnp.float32) * 0.05
    b = jax.random.normal(k2, (dout,), jnp.float32) * 0.05
    return w, b


def _init_self_attn(key, D):
    ks = jax.random.split(key, 4)
    wq, bq = _init_linear(ks[0], D, D)
    wk, bk = _init_linear(ks[1], D, D)
    wv, bv = _init_linear(ks[2], D, D)
    wo, bo = _init_linear(ks[3], D, D)
    return dict(
        wqkv=jnp.concatenate([wq, wk, wv], axis=1).astype(jnp.bfloat16),
        bqkv=jnp.concatenate([bq, bk, bv]).reshape(1, 3 * D),
        wo=wo.astype(jnp.bfloat16), bo=bo.reshape(1, D),
        ln_a=jnp.ones((1, D), jnp.float32), ln_b=jnp.zeros((1, D), jnp.float32),
    )


def _init_cross_attn(key, D):
    ks = jax.random.split(key, 4)
    wq, bq = _init_linear(ks[0], D, D)
    wk, bk = _init_linear(ks[1], D, D)
    wv, bv = _init_linear(ks[2], D, D)
    wo, bo = _init_linear(ks[3], D, D)
    return dict(
        wq=wq.astype(jnp.bfloat16), bq=bq.reshape(1, D),
        wkv=jnp.concatenate([wk, wv], axis=1).astype(jnp.bfloat16),
        bkv=jnp.concatenate([bk, bv]).reshape(1, 2 * D),
        wo=wo.astype(jnp.bfloat16), bo=bo.reshape(1, D),
        ln_a=jnp.ones((1, D), jnp.float32), ln_b=jnp.zeros((1, D), jnp.float32),
    )


def _init_ffn(key, D, Dff):
    k1, k2 = jax.random.split(key)
    w1, b1 = _init_linear(k1, D, Dff)
    w2, b2 = _init_linear(k2, Dff, D)
    return dict(
        w1=w1.astype(jnp.bfloat16), b1=b1.reshape(1, Dff),
        w2=w2.astype(jnp.bfloat16), b2=b2.reshape(1, D),
        ln_a=jnp.ones((1, D), jnp.float32), ln_b=jnp.zeros((1, D), jnp.float32),
    )


def init_decoder_params(key, N, D, Dff):
    layers = []
    for _ in range(N):
        k_self, k_src, k_ff, key = jax.random.split(key, 4)
        layers.append(dict(
            self_attn=_init_self_attn(k_self, D),
            src_attn=_init_cross_attn(k_src, D),
            ff=_init_ffn(k_ff, D, Dff),
        ))
    return dict(
        layers=layers,
        final_ln_a=jnp.ones((1, D), jnp.float32),
        final_ln_b=jnp.zeros((1, D), jnp.float32),
    )


# --------------------------- main ------------------------------------------------

if __name__ == "__main__":
    B, Lt, Ls, D, H, Dff, N = 2, 8, 8, 32, 4, 64, 2

    key = jax.random.PRNGKey(0)
    kx, km, kp = jax.random.split(key, 3)

    x = jax.random.normal(kx, (B, Lt, D), jnp.float32)        # tgt embeddings
    memory = jax.random.normal(km, (B, Ls, D), jnp.float32)   # encoder output
    src_mask = jnp.ones((B, 1, Ls), jnp.float32)              # [B, 1, input_len]
    tgt_mask = jnp.broadcast_to(                              # causal [B, tgt_len, tgt_len]
        jnp.tril(jnp.ones((Lt, Lt), jnp.float32))[None], (B, Lt, Lt)
    )

    params = init_decoder_params(kp, N, D, Dff)

    out = decoder_forward(x, memory, src_mask, tgt_mask, params, H)
    out = jax.block_until_ready(out)

    assert out.shape == (B, Lt, D)
    assert bool(jnp.all(jnp.isfinite(out)))
    print("KERNEL_OK")
</pallas_src>

<mosaic_0001>
module attributes {stable_mosaic.version = 11 : i64} {
  func.func @_self_attn_kernel(%arg0: i32, %arg1: memref<1x8x32xf32, #tpu.memory_space<vmem>>, %arg2: memref<32x96xbf16, #tpu.memory_space<vmem>>, %arg3: memref<1x96xf32, #tpu.memory_space<vmem>>, %arg4: memref<32x32xbf16, #tpu.memory_space<vmem>>, %arg5: memref<1x32xf32, #tpu.memory_space<vmem>>, %arg6: memref<1x32xf32, #tpu.memory_space<vmem>>, %arg7: memref<1x32xf32, #tpu.memory_space<vmem>>, %arg8: memref<1x8x8xf32, #tpu.memory_space<vmem>>, %arg9: memref<1x8x32xf32, #tpu.memory_space<vmem>>) attributes {dimension_semantics = [#tpu.dimension_semantics<parallel>], iteration_bounds = array<i64: 2>, scalar_prefetch = 0 : i64, scratch_operands = 0 : i64, tpu.core_type = #tpu.core_type<tc>, window_params = [{transform_indices = @transform_0, window_bounds = array<i64: 1, 8, 32>}, {pipeline_mode = #tpu.pipeline_mode<synchronous>, transform_indices = @transform_1, window_bounds = array<i64: 32, 96>}, {pipeline_mode = #tpu.pipeline_mode<synchronous>, transform_indices = @transform_2, window_bounds = array<i64: 1, 96>}, {pipeline_mode = #tpu.pipeline_mode<synchronous>, transform_indices = @transform_3, window_bounds = array<i64: 32, 32>}, {pipeline_mode = #tpu.pipeline_mode<synchronous>, transform_indices = @transform_4, window_bounds = array<i64: 1, 32>}, {pipeline_mode = #tpu.pipeline_mode<synchronous>, transform_indices = @transform_5, window_bounds = array<i64: 1, 32>}, {pipeline_mode = #tpu.pipeline_mode<synchronous>, transform_indices = @transform_6, window_bounds = array<i64: 1, 32>}, {transform_indices = @transform_7, window_bounds = array<i64: 1, 8, 8>}, {transform_indices = @transform_8, window_bounds = array<i64: 1, 8, 32>}]} {
    %c0 = arith.constant 0 : index
    %c0_0 = arith.constant 0 : index
    %c0_1 = arith.constant 0 : index
    %0 = vector.load %arg1[%c0, %c0_0, %c0_1] : memref<1x8x32xf32, #tpu.memory_space<vmem>>, vector<1x8x32xf32>
    %1 = vector.shape_cast %0 : vector<1x8x32xf32> to vector<8x32xf32>
    %c0_2 = arith.constant 0 : index
    %c0_3 = arith.constant 0 : index
    %2 = vector.load %arg6[%c0_2, %c0_3] : memref<1x32xf32, #tpu.memory_space<vmem>>, vector<1x32xf32>
    %c0_4 = arith.constant 0 : index
    %c0_5 = arith.constant 0 : index
    %3 = vector.load %arg7[%c0_4, %c0_5] : memref<1x32xf32, #tpu.memory_space<vmem>>, vector<1x32xf32>
    %cst = arith.constant dense<0.000000e+00> : vector<8xf32>
    %4 = vector.multi_reduction <add>, %1, %cst [1] : vector<8x32xf32> to vector<8xf32>
    %5 = vector.shape_cast %4 : vector<8xf32> to vector<8x1xf32>
    %cst_6 = arith.constant 3.200000e+01 : f32
    %6 = vector.broadcast %cst_6 : f32 to vector<8x1xf32>
    %7 = arith.divf %5, %6 : vector<8x1xf32>
    %8 = vector.broadcast %7 : vector<8x1xf32> to vector<8x32xf32>
    %9 = arith.subf %1, %8 : vector<8x32xf32>
    %10 = arith.mulf %9, %9 : vector<8x32xf32>
    %cst_7 = arith.constant dense<0.000000e+00> : vector<8xf32>
    %11 = vector.multi_reduction <add>, %10, %cst_7 [1] : vector<8x32xf32> to vector<8xf32>
    %12 = vector.shape_cast %11 : vector<8xf32> to vector<8x1xf32>
    %cst_8 = arith.constant 3.100000e+01 : f32
    %13 = vector.broadcast %cst_8 : f32 to vector<8x1xf32>
    %14 = arith.divf %12, %13 : vector<8x1xf32>
    %15 = math.sqrt %14 : vector<8x1xf32>
    %cst_9 = arith.constant 9.99999997E-7 : f32
    %16 = vector.broadcast %cst_9 : f32 to vector<8x1xf32>
    %17 = arith.addf %15, %16 : vector<8x1xf32>
    %18 = tpu.reciprocal %17 {approx = true} : vector<8x1xf32> -> vector<8x1xf32>
    %19 = vector.broadcast %7 : vector<8x1xf32> to vector<8x32xf32>
    %20 = arith.subf %1, %19 : vector<8x32xf32>
    %21 = vector.broadcast %2 : vector<1x32xf32> to vector<8x32xf32>
    %22 = arith.mulf %21, %20 : vector<8x32xf32>
    %23 = vector.broadcast %18 : vector<8x1xf32> to vector<8x32xf32>
    %24 = arith.mulf %22, %23 : vector<8x32xf32>
    %25 = vector.broadcast %3 : vector<1x32xf32> to vector<8x32xf32>
    %26 = arith.addf %24, %25 : vector<8x32xf32>
    %27 = arith.truncf %26 : vector<8x32xf32> to vector<8x32xbf16>
    %c0_10 = arith.constant 0 : index
    %c0_11 = arith.constant 0 : index
    %28 = vector.load %arg2[%c0_10, %c0_11] : memref<32x96xbf16, #tpu.memory_space<vmem>>, vector<32x96xbf16>
    %cst_12 = arith.constant dense<0.000000e+00> : vector<8x96xf32>
    %29 = tpu.matmul %27, %28, %cst_12 {dimension_numbers = #tpu.dot_dimension_numbers<[1], [0], [0], [1], [0, 0, 1, 1], [], []>} : vector<8x32xbf16>, vector<32x96xbf16>, vector<8x96xf32> -> vector<8x96xf32>
    %c0_13 = arith.constant 0 : index
    %c0_14 = arith.constant 0 : index
    %30 = vector.load %arg3[%c0_13, %c0_14] : memref<1x96xf32, #tpu.memory_space<vmem>>, vector<1x96xf32>
    %31 = vector.broadcast %30 : vector<1x96xf32> to vector<8x96xf32>
    %32 = arith.addf %29, %31 : vector<8x96xf32>
    %c0_15 = arith.constant 0 : index
    %c0_16 = arith.constant 0 : index
    %c0_17 = arith.constant 0 : index
    %33 = vector.load %arg8[%c0_15, %c0_16, %c0_17] : memref<1x8x8xf32, #tpu.memory_space<vmem>>, vector<1x8x8xf32>
    %34 = vector.shape_cast %33 : vector<1x8x8xf32> to vector<8x8xf32>
    %35 = vector.extract_strided_slice %32 {offsets = [0, 0], sizes = [8, 8], strides = [1, 1]} : vector<8x96xf32> to vector<8x8xf32>
    %36 = vector.extract_strided_slice %32 {offsets = [0, 32], sizes = [8, 8], strides = [1, 1]} : vector<8x96xf32> to vector<8x8xf32>
    %37 = vector.extract_strided_slice %32 {offsets = [0, 64], sizes = [8, 8], strides = [1, 1]} : vector<8x96xf32> to vector<8x8xf32>
    %38 = arith.truncf %35 : vector<8x8xf32> to vector<8x8xbf16>
    %39 = arith.truncf %36 : vector<8x8xf32> to vector<8x8xbf16>
    %cst_18 = arith.constant dense<0.000000e+00> : vector<8x8xf32>
    %40 = tpu.matmul %38, %39, %cst_18 {dimension_numbers = #tpu.dot_dimension_numbers<[1], [1], [0], [0], [0, 0, 1, 0], [], []>} : vector<8x8xbf16>, vector<8x8xbf16>, vector<8x8xf32> -> vector<8x8xf32>
    %cst_19 = arith.constant 0.353553385 : f32
    %41 = vector.broadcast %cst_19 : f32 to vector<8x8xf32>
    %42 = arith.mulf %40, %41 : vector<8x8xf32>
    %cst_20 = arith.constant 0.000000e+00 : f32
    %43 = vector.broadcast %cst_20 : f32 to vector<8x8xf32>
    %44 = arith.cmpf ogt, %34, %43 : vector<8x8xf32>
    %cst_21 = arith.constant -1.000000e+09 : f32
    %45 = vector.broadcast %cst_21 : f32 to vector<8x8xf32>
    %46 = arith.select %44, %42, %45 : vector<8x8xi1>, vector<8x8xf32>
    %cst_22 = arith.constant dense<0xFF800000> : vector<8xf32>
    %47 = vector.multi_reduction <maximumf>, %46, %cst_22 [1] : vector<8x8xf32> to vector<8xf32>
    %48 = vector.shape_cast %47 : vector<8xf32> to vector<8x1xf32>
    %49 = vector.broadcast %48 : vector<8x1xf32> to vector<8x8xf32>
    %50 = arith.subf %46, %49 : vector<8x8xf32>
    %51 = math.exp %50 : vector<8x8xf32>
    %cst_23 = arith.constant dense<0.000000e+00> : vector<8xf32>
    %52 = vector.multi_reduction <add>, %51, %cst_23 [1] : vector<8x8xf32> to vector<8xf32>
    %53 = vector.shape_cast %52 : vector<8xf32> to vector<8x1xf32>
    %54 = tpu.reciprocal %53 {approx = true} : vector<8x1xf32> -> vector<8x1xf32>
    %55 = vector.broadcast %54 : vector<8x1xf32> to vector<8x8xf32>
    %56 = arith.mulf %51, %55 : vector<8x8xf32>
    %57 = arith.truncf %56 : vector<8x8xf32> to vector<8x8xbf16>
    %58 = arith.truncf %37 : vector<8x8xf32> to vector<8x8xbf16>
    %cst_24 = arith.constant dense<0.000000e+00> : vector<8x8xf32>
    %59 = tpu.matmul %57, %58, %cst_24 {dimension_numbers = #tpu.dot_dimension_numbers<[1], [0], [0], [1], [0, 0, 1, 1], [], []>} : vector<8x8xbf16>, vector<8x8xbf16>, vector<8x8xf32> -> vector<8x8xf32>
    %60 = vector.extract_strided_slice %32 {offsets = [0, 8], sizes = [8, 8], strides = [1, 1]} : vector<8x96xf32> to vector<8x8xf32>
    %61 = vector.extract_strided_slice %32 {offsets = [0, 40], sizes = [8, 8], strides = [1, 1]} : vector<8x96xf32> to vector<8x8xf32>
    %62 = vector.extract_strided_slice %32 {offsets = [0, 72], sizes = [8, 8], strides = [1, 1]} : vector<8x96xf32> to vector<8x8xf32>
    %63 = arith.truncf %60 : vector<8x8xf32> to vector<8x8xbf16>
    %64 = arith.truncf %61 : vector<8x8xf32> to vector<8x8xbf16>
    %cst_25 = arith.constant dense<0.000000e+00> : vector<8x8xf32>
    %65 = tpu.matmul %63, %64, %cst_25 {dimension_numbers = #tpu.dot_dimension_numbers<[1], [1], [0], [0], [0, 0, 1, 0], [], []>} : vector<8x8xbf16>, vector<8x8xbf16>, vector<8x8xf32> -> vector<8x8xf32>
    %cst_26 = arith.constant 0.353553385 : f32
    %66 = vector.broadcast %cst_26 : f32 to vector<8x8xf32>
    %67 = arith.mulf %65, %66 : vector<8x8xf32>
    %cst_27 = arith.constant 0.000000e+00 : f32
    %68 = vector.broadcast %cst_27 : f32 to vector<8x8xf32>
    %69 = arith.cmpf ogt, %34, %68 : vector<8x8xf32>
    %cst_28 = arith.constant -1.000000e+09 : f32
    %70 = vector.broadcast %cst_28 : f32 to vector<8x8xf32>
    %71 = arith.select %69, %67, %70 : vector<8x8xi1>, vector<8x8xf32>
    %cst_29 = arith.constant dense<0xFF800000> : vector<8xf32>
    %72 = vector.multi_reduction <maximumf>, %71, %cst_29 [1] : vector<8x8xf32> to vector<8xf32>
    %73 = vector.shape_cast %72 : vector<8xf32> to vector<8x1xf32>
    %74 = vector.broadcast %73 : vector<8x1xf32> to vector<8x8xf32>
    %75 = arith.subf %71, %74 : vector<8x8xf32>
    %76 = math.exp %75 : vector<8x8xf32>
    %cst_30 = arith.constant dense<0.000000e+00> : vector<8xf32>
    %77 = vector.multi_reduction <add>, %76, %cst_30 [1] : vector<8x8xf32> to vector<8xf32>
    %78 = vector.shape_cast %77 : vector<8xf32> to vector<8x1xf32>
    %79 = tpu.reciprocal %78 {approx = true} : vector<8x1xf32> -> vector<8x1xf32>
    %80 = vector.broadcast %79 : vector<8x1xf32> to vector<8x8xf32>
    %81 = arith.mulf %76, %80 : vector<8x8xf32>
    %82 = arith.truncf %81 : vector<8x8xf32> to vector<8x8xbf16>
    %83 = arith.truncf %62 : vector<8x8xf32> to vector<8x8xbf16>
    %cst_31 = arith.constant dense<0.000000e+00> : vector<8x8xf32>
    %84 = tpu.matmul %82, %83, %cst_31 {dimension_numbers = #tpu.dot_dimension_numbers<[1], [0], [0], [1], [0, 0, 1, 1], [], []>} : vector<8x8xbf16>, vector<8x8xbf16>, vector<8x8xf32> -> vector<8x8xf32>
    %85 = vector.extract_strided_slice %32 {offsets = [0, 16], sizes = [8, 8], strides = [1, 1]} : vector<8x96xf32> to vector<8x8xf32>
    %86 = vector.extract_strided_slice %32 {offsets = [0, 48], sizes = [8, 8], strides = [1, 1]} : vector<8x96xf32> to vector<8x8xf32>
    %87 = vector.extract_strided_slice %32 {offsets = [0, 80], sizes = [8, 8], strides = [1, 1]} : vector<8x96xf32> to vector<8x8xf32>
    %88 = arith.truncf %85 : vector<8x8xf32> to vector<8x8xbf16>
    %89 = arith.truncf %86 : vector<8x8xf32> to vector<8x8xbf16>
    %cst_32 = arith.constant dense<0.000000e+00> : vector<8x8xf32>
    %90 = tpu.matmul %88, %89, %cst_32 {dimension_numbers = #tpu.dot_dimension_numbers<[1], [1], [0], [0], [0, 0, 1, 0], [], []>} : vector<8x8xbf16>, vector<8x8xbf16>, vector<8x8xf32> -> vector<8x8xf32>
    %cst_33 = arith.constant 0.353553385 : f32
    %91 = vector.broadcast %cst_33 : f32 to vector<8x8xf32>
    %92 = arith.mulf %90, %91 : vector<8x8xf32>
    %cst_34 = arith.constant 0.000000e+00 : f32
    %93 = vector.broadcast %cst_34 : f32 to vector<8x8xf32>
    %94 = arith.cmpf ogt, %34, %93 : vector<8x8xf32>
    %cst_35 = arith.constant -1.000000e+09 : f32
    %95 = vector.broadcast %cst_35 : f32 to vector<8x8xf32>
    %96 = arith.select %94, %92, %95 : vector<8x8xi1>, vector<8x8xf32>
    %cst_36 = arith.constant dense<0xFF800000> : vector<8xf32>
    %97 = vector.multi_reduction <maximumf>, %96, %cst_36 [1] : vector<8x8xf32> to vector<8xf32>
    %98 = vector.shape_cast %97 : vector<8xf32> to vector<8x1xf32>
    %99 = vector.broadcast %98 : vector<8x1xf32> to vector<8x8xf32>
    %100 = arith.subf %96, %99 : vector<8x8xf32>
    %101 = math.exp %100 : vector<8x8xf32>
    %cst_37 = arith.constant dense<0.000000e+00> : vector<8xf32>
    %102 = vector.multi_reduction <add>, %101, %cst_37 [1] : vector<8x8xf32> to vector<8xf32>
    %103 = vector.shape_cast %102 : vector<8xf32> to vector<8x1xf32>
    %104 = tpu.reciprocal %103 {approx = true} : vector<8x1xf32> -> vector<8x1xf32>
    %105 = vector.broadcast %104 : vector<8x1xf32> to vector<8x8xf32>
    %106 = arith.mulf %101, %105 : vector<8x8xf32>
    %107 = arith.truncf %106 : vector<8x8xf32> to vector<8x8xbf16>
    %108 = arith.truncf %87 : vector<8x8xf32> to vector<8x8xbf16>
    %cst_38 = arith.constant dense<0.000000e+00> : vector<8x8xf32>
    %109 = tpu.matmul %107, %108, %cst_38 {dimension_numbers = #tpu.dot_dimension_numbers<[1], [0], [0], [1], [0, 0, 1, 1], [], []>} : vector<8x8xbf16>, vector<8x8xbf16>, vector<8x8xf32> -> vector<8x8xf32>
    %110 = vector.extract_strided_slice %32 {offsets = [0, 24], sizes = [8, 8], strides = [1, 1]} : vector<8x96xf32> to vector<8x8xf32>
    %111 = vector.extract_strided_slice %32 {offsets = [0, 56], sizes = [8, 8], strides = [1, 1]} : vector<8x96xf32> to vector<8x8xf32>
    %112 = vector.extract_strided_slice %32 {offsets = [0, 88], sizes = [8, 8], strides = [1, 1]} : vector<8x96xf32> to vector<8x8xf32>
    %113 = arith.truncf %110 : vector<8x8xf32> to vector<8x8xbf16>
    %114 = arith.truncf %111 : vector<8x8xf32> to vector<8x8xbf16>
    %cst_39 = arith.constant dense<0.000000e+00> : vector<8x8xf32>
    %115 = tpu.matmul %113, %114, %cst_39 {dimension_numbers = #tpu.dot_dimension_numbers<[1], [1], [0], [0], [0, 0, 1, 0], [], []>} : vector<8x8xbf16>, vector<8x8xbf16>, vector<8x8xf32> -> vector<8x8xf32>
    %cst_40 = arith.constant 0.353553385 : f32
    %116 = vector.broadcast %cst_40 : f32 to vector<8x8xf32>
    %117 = arith.mulf %115, %116 : vector<8x8xf32>
    %cst_41 = arith.constant 0.000000e+00 : f32
    %118 = vector.broadcast %cst_41 : f32 to vector<8x8xf32>
    %119 = arith.cmpf ogt, %34, %118 : vector<8x8xf32>
    %cst_42 = arith.constant -1.000000e+09 : f32
    %120 = vector.broadcast %cst_42 : f32 to vector<8x8xf32>
    %121 = arith.select %119, %117, %120 : vector<8x8xi1>, vector<8x8xf32>
    %cst_43 = arith.constant dense<0xFF800000> : vector<8xf32>
    %122 = vector.multi_reduction <maximumf>, %121, %cst_43 [1] : vector<8x8xf32> to vector<8xf32>
    %123 = vector.shape_cast %122 : vector<8xf32> to vector<8x1xf32>
    %124 = vector.broadcast %123 : vector<8x1xf32> to vector<8x8xf32>
    %125 = arith.subf %121, %124 : vector<8x8xf32>
    %126 = math.exp %125 : vector<8x8xf32>
    %cst_44 = arith.constant dense<0.000000e+00> : vector<8xf32>
    %127 = vector.multi_reduction <add>, %126, %cst_44 [1] : vector<8x8xf32> to vector<8xf32>
    %128 = vector.shape_cast %127 : vector<8xf32> to vector<8x1xf32>
    %129 = tpu.reciprocal %128 {approx = true} : vector<8x1xf32> -> vector<8x1xf32>
    %130 = vector.broadcast %129 : vector<8x1xf32> to vector<8x8xf32>
    %131 = arith.mulf %126, %130 : vector<8x8xf32>
    %132 = arith.truncf %131 : vector<8x8xf32> to vector<8x8xbf16>
    %133 = arith.truncf %112 : vector<8x8xf32> to vector<8x8xbf16>
    %cst_45 = arith.constant dense<0.000000e+00> : vector<8x8xf32>
    %134 = tpu.matmul %132, %133, %cst_45 {dimension_numbers = #tpu.dot_dimension_numbers<[1], [0], [0], [1], [0, 0, 1, 1], [], []>} : vector<8x8xbf16>, vector<8x8xbf16>, vector<8x8xf32> -> vector<8x8xf32>
    %135 = tpu.concatenate %59, %84, %109, %134 in 1 : vector<8x8xf32>, vector<8x8xf32>, vector<8x8xf32>, vector<8x8xf32> -> vector<8x32xf32>
    %136 = arith.truncf %135 : vector<8x32xf32> to vector<8x32xbf16>
    %c0_46 = arith.constant 0 : index
    %c0_47 = arith.constant 0 : index
    %137 = vector.load %arg4[%c0_46, %c0_47] : memref<32x32xbf16, #tpu.memory_space<vmem>>, vector<32x32xbf16>
    %cst_48 = arith.constant dense<0.000000e+00> : vector<8x32xf32>
    %138 = tpu.matmul %136, %137, %cst_48 {dimension_numbers = #tpu.dot_dimension_numbers<[1], [0], [0], [1], [0, 0, 1, 1], [], []>} : vector<8x32xbf16>, vector<32x32xbf16>, vector<8x32xf32> -> vector<8x32xf32>
    %c0_49 = arith.constant 0 : index
    %c0_50 = arith.constant 0 : index
    %139 = vector.load %arg5[%c0_49, %c0_50] : memref<1x32xf32, #tpu.memory_space<vmem>>, vector<1x32xf32>
    %140 = vector.broadcast %139 : vector<1x32xf32> to vector<8x32xf32>
    %141 = arith.addf %138, %140 : vector<8x32xf32>
    %142 = arith.addf %141, %1 : vector<8x32xf32>
    %c0_51 = arith.constant 0 : index
    %c0_52 = arith.constant 0 : index
    %c0_53 = arith.constant 0 : index
    %143 = vector.load %arg9[%c0_51, %c0_52, %c0_53] : memref<1x8x32xf32, #tpu.memory_space<vmem>>, vector<1x8x32xf32>
    %144 = vector.shape_cast %143 : vector<1x8x32xf32> to vector<8x32xf32>
    %145 = vector.shape_cast %142 : vector<8x32xf32> to vector<1x8x32xf32>
    tpu.vector_store %arg9[%c0_51, %c0_52, %c0_53], %145 {strides = array<i32>} : memref<1x8x32xf32, #tpu.memory_space<vmem>>, vector<1x8x32xf32>,
    return
  }
  func.func @transform_0(%arg0: i32) -> (i32, i32, i32) {
    %c0_i32 = arith.constant 0 : i32
    %c0_i32_0 = arith.constant 0 : i32
    %c0_i32_1 = arith.constant 0 : i32
    return %arg0, %c0_i32, %c0_i32_0 : i32, i32, i32
  }
  func.func @transform_1(%arg0: i32) -> (i32, i32) {
    %c0_i32 = arith.constant 0 : i32
    %c0_i32_0 = arith.constant 0 : i32
    %c0_i32_1 = arith.constant 0 : i32
    return %c0_i32, %c0_i32_0 : i32, i32
  }
  func.func @transform_2(%arg0: i32) -> (i32, i32) {
    %c0_i32 = arith.constant 0 : i32
    %c0_i32_0 = arith.constant 0 : i32
    %c0_i32_1 = arith.constant 0 : i32
    return %c0_i32, %c0_i32_0 : i32, i32
  }
  func.func @transform_3(%arg0: i32) -> (i32, i32) {
    %c0_i32 = arith.constant 0 : i32
    %c0_i32_0 = arith.constant 0 : i32
    %c0_i32_1 = arith.constant 0 : i32
    return %c0_i32, %c0_i32_0 : i32, i32
  }
  func.func @transform_4(%arg0: i32) -> (i32, i32) {
    %c0_i32 = arith.constant 0 : i32
    %c0_i32_0 = arith.constant 0 : i32
    %c0_i32_1 = arith.constant 0 : i32
    return %c0_i32, %c0_i32_0 : i32, i32
  }
  func.func @transform_5(%arg0: i32) -> (i32, i32) {
    %c0_i32 = arith.constant 0 : i32
    %c0_i32_0 = arith.constant 0 : i32
    %c0_i32_1 = arith.constant 0 : i32
    return %c0_i32, %c0_i32_0 : i32, i32
  }
  func.func @transform_6(%arg0: i32) -> (i32, i32) {
    %c0_i32 = arith.constant 0 : i32
    %c0_i32_0 = arith.constant 0 : i32
    %c0_i32_1 = arith.constant 0 : i32
    return %c0_i32, %c0_i32_0 : i32, i32
  }
  func.func @transform_7(%arg0: i32) -> (i32, i32, i32) {
    %c0_i32 = arith.constant 0 : i32
    %c0_i32_0 = arith.constant 0 : i32
    %c0_i32_1 = arith.constant 0 : i32
    return %arg0, %c0_i32, %c0_i32_0 : i32, i32, i32
  }
  func.func @transform_8(%arg0: i32) -> (i32, i32, i32) {
    %c0_i32 = arith.constant 0 : i32
    %c0_i32_0 = arith.constant 0 : i32
    %c0_i32_1 = arith.constant 0 : i32
    return %arg0, %c0_i32, %c0_i32_0 : i32, i32, i32
  }
}

</mosaic_0001>

<llo_original>
// kernel: tpu_custom_call.1
$region0: #{tpu_custom_call.1}
  #allocation0 [shape = 'u32[]', space=smem, size = 0x4, offset = 0x4, fixed_abs, tag = 'smem constant byte address 0x4 - core index']
  #allocation1 [shape = 'u32[144,128]{1,0:T(1,128)}', space=vmem, size = 0x12000, scoped, tag = 'internal scratch']
  %s0 = inlined_call_operand.hbm [shape: f32[2,8,32], index: 0, kind: input, shape index: {}]
  %s1 = inlined_call_operand.hbm [shape: bf16[32,96], index: 1, kind: input, shape index: {}]
  %s2 = inlined_call_operand.vmem [shape: f32[1,96], index: 2, kind: input, shape index: {}]
  %s3 = inlined_call_operand.hbm [shape: bf16[32,32], index: 3, kind: input, shape index: {}]
  %s4 = inlined_call_operand.vmem [shape: f32[1,32], index: 4, kind: input, shape index: {}]
  %s5 = inlined_call_operand.vmem [shape: f32[1,32], index: 5, kind: input, shape index: {}]
  %s6 = inlined_call_operand.vmem [shape: f32[1,32], index: 6, kind: input, shape index: {}]
  %s7 = inlined_call_operand.hbm [shape: f32[2,8,8], index: 7, kind: input, shape index: {}]
  %s8 = inlined_call_operand.hbm [shape: f32[2,8,32], index: 8, kind: output, shape index: {}]
  %s9 = sld [smem:[#allocation0]]
  $region81: #{tpu_custom_call.1} parent=0
    _
  %s11 = ssub.s32 1, %s9
  %s12 = scalar_select 0, %s11, %s9
  $region1: #{tpu_custom_call.1} parent=0
    #allocation2 [shape = 'u8[8192]{0}', space=vmem, size = 0x2000, scoped, tag = 'input window, operand 0']
    #allocation3 [shape = 's32[2]{0}', space=sflag, size = 0x8, scoped, tag = 'scoped memory for tpu_custom_call.1']
    #allocation4 [shape = 's32[2]{0}', space=sflag, size = 0x8, scoped, tag = 'scoped memory for tpu_custom_call.1']
    #allocation5 [shape = 'u8[8192]{0}', space=vmem, size = 0x2000, scoped, tag = 'input window, operand 1, single buffered']
    #allocation6 [shape = 's32[1]{0}', space=sflag, size = 0x4, scoped, tag = 'scoped memory for tpu_custom_call.1']
    #allocation7 [shape = 'u8[8192]{0}', space=vmem, size = 0x2000, scoped, tag = 'input window, operand 3, single buffered']
    #allocation8 [shape = 'u8[8192]{0}', space=vmem, size = 0x2000, scoped, tag = 'input window, operand 7']
    #allocation9 [shape = 's32[2]{0}', space=sflag, size = 0x8, scoped, tag = 'scoped memory for tpu_custom_call.1']
    #allocation10 [shape = 'u8[8192]{0}', space=vmem, size = 0x2000, scoped, tag = 'output window, operand 0']
    %13 = vsyncpa [#allocation3], 0
    %s14 = scalar_lea.sflag [#allocation3], 1
    %15 = vsyncpa %s14, 0
    %16 = vsyncpa [#allocation6], 0
    %17 = vsyncpa [#allocation9], 0
    %s18 = scalar_lea.sflag [#allocation9], 1
    %19 = vsyncpa %s18, 0
    %20 = vsyncpa [#allocation4], 0
    %s21 = scalar_lea.sflag [#allocation4], 1
    %22 = vsyncpa %s21, 0
    loop: start=0, step=1, limit=4
    $region2: #{tpu_custom_call.1} parent=1 // loop_pre_header
      _
    $region3: #{tpu_custom_call.1} parent=1 // loop_header
      %s24 = sphi 0, %s28
      %p25 = scmp.ge.s32.totalorder %s24, 4
      %s34 = sphi 0, %s36
      %s37 = sphi 0, %s34
      %s38 = sphi 0, %s37
      %s54 = sphi 0, %s38
      %s58 = sphi 0, %s58
      %s60 = sphi 0, %s58
      %s61 = sphi 0, %s60
      %s75 = sphi 0, %s61
      %s79 = sphi 0, %s79
      %s81 = sphi 0, %s79
      %s82 = sphi 0, %s81
      %s96 = sphi 0, %s82
      %s100 = sphi 0, %s100
      %s102 = sphi 0, %s100
      %s103 = sphi 0, %s102
      %s117 = sphi 0, %s103
      %s121 = sphi 0, %s121
      %s123 = sphi 0, %s121
      %s124 = sphi 0, %s123
      %s138 = sphi 0, %s124
      %s142 = sphi 0, %s142
      %s144 = sphi 0, %s142
      %s145 = sphi 0, %s144
      %s159 = sphi 0, %s145
      %s163 = sphi 0, %s163
      %s165 = sphi 0, %s163
      %s166 = sphi 0, %s165
      %s180 = sphi 0, %s166
      %s186 = sphi 0, %s188
      %s189 = sphi 0, %s186
      %s190 = sphi 0, %s189
      %s206 = sphi 0, %s190
      %s212 = sphi 0, %s214
      %s215 = sphi 0, %s212
      %s216 = sphi 0, %s215
      %s232 = sphi 0, %s216
    $region4: #{tpu_custom_call.1} parent=1 // loop_header_branch
      %27 = sbr.rel (%p25) target = $region8
    $region5: #{tpu_custom_call.1} parent=1 // loop_body
      %s29 = ssub.s32 %s24, 1
      %s30 = ssub.s32 %s24, 2
      %s31 = sadd.s32 %s24, 1
      %s32 = ssub.s32 %s24, %s31
      %p33 = scmp.eq.s32.totalorder %s32, 0
      %s35 = sadd.s32 %s34, 1
      %s36 = scalar_select %p33, %s34, %s35
      %p39 = pneg %p33
      %p40 = scmp.eq.s32.totalorder %s24, 1
      %p41 = por %p39, %p40
      %p42 = scmp.ne.s32.totalorder %s34, %s37
      %p43 = scmp.eq.s32.totalorder %s24, 0
      %p44 = por %p42, %p43
      %p45 = scmp.ne.s32.totalorder %s34, %s37
      %p46 = scmp.eq.s32.totalorder %s29, 1
      %p47 = por %p45, %p46
      %p48 = scmp.ne.s32.totalorder %s37, %s38
      %p49 = scmp.eq.s32.totalorder %s29, 0
      %p50 = por %p48, %p49
      %p51 = scmp.ne.s32.totalorder %s37, %s38
      %p52 = scmp.eq.s32.totalorder %s30, 1
      %p53 = por %p51, %p52
      %p55 = scmp.ne.s32.totalorder %s38, %s54
      %p56 = scmp.eq.s32.totalorder %s30, 0
      %p57 = por %p55, %p56
      %s59 = sadd.s32 %s58, 1
      %p62 = scmp.eq.s32.totalorder %s24, 1
      %p63 = scmp.ne.s32.totalorder %s58, %s60
      %p64 = scmp.eq.s32.totalorder %s24, 0
      %p65 = por %p63, %p64
      %p66 = scmp.ne.s32.totalorder %s58, %s60
      %p67 = scmp.eq.s32.totalorder %s29, 1
      %p68 = por %p66, %p67
      %p69 = scmp.ne.s32.totalorder %s60, %s61
      %p70 = scmp.eq.s32.totalorder %s29, 0
      %p71 = por %p69, %p70
      %p72 = scmp.ne.s32.totalorder %s60, %s61
      %p73 = scmp.eq.s32.totalorder %s30, 1
      %p74 = por %p72, %p73
      %p76 = scmp.ne.s32.totalorder %s61, %s75
      %p77 = scmp.eq.s32.totalorder %s30, 0
      %p78 = por %p76, %p77
      %s80 = sadd.s32 %s79, 1
      %p83 = scmp.eq.s32.totalorder %s24, 1
      %p84 = scmp.ne.s32.totalorder %s79, %s81
      %p85 = scmp.eq.s32.totalorder %s24, 0
      %p86 = por %p84, %p85
      %p87 = scmp.ne.s32.totalorder %s79, %s81
      %p88 = scmp.eq.s32.totalorder %s29, 1
      %p89 = por %p87, %p88
      %p90 = scmp.ne.s32.totalorder %s81, %s82
      %p91 = scmp.eq.s32.totalorder %s29, 0
      %p92 = por %p90, %p91
      %p93 = scmp.ne.s32.totalorder %s81, %s82
      %p94 = scmp.eq.s32.totalorder %s30, 1
      %p95 = por %p93, %p94
      %p97 = scmp.ne.s32.totalorder %s82, %s96
      %p98 = scmp.eq.s32.totalorder %s30, 0
      %p99 = por %p97, %p98
      %s101 = sadd.s32 %s100, 1
      %p104 = scmp.eq.s32.totalorder %s24, 1
      %p105 = scmp.ne.s32.totalorder %s100, %s102
      %p106 = scmp.eq.s32.totalorder %s24, 0
      %p107 = por %p105, %p106
      %p108 = scmp.ne.s32.totalorder %s100, %s102
      %p109 = scmp.eq.s32.totalorder %s29, 1
      %p110 = por %p108, %p109
      %p111 = scmp.ne.s32.totalorder %s102, %s103
      %p112 = scmp.eq.s32.totalorder %s29, 0
      %p113 = por %p111, %p112
      %p114 = scmp.ne.s32.totalorder %s102, %s103
      %p115 = scmp.eq.s32.totalorder %s30, 1
      %p116 = por %p114, %p115
      %p118 = scmp.ne.s32.totalorder %s103, %s117
      %p119 = scmp.eq.s32.totalorder %s30, 0
      %p120 = por %p118, %p119
      %s122 = sadd.s32 %s121, 1
      %p125 = scmp.eq.s32.totalorder %s24, 1
      %p126 = scmp.ne.s32.totalorder %s121, %s123
      %p127 = scmp.eq.s32.totalorder %s24, 0
      %p128 = por %p126, %p127
      %p129 = scmp.ne.s32.totalorder %s121, %s123
      %p130 = scmp.eq.s32.totalorder %s29, 1
      %p131 = por %p129, %p130
      %p132 = scmp.ne.s32.totalorder %s123, %s124
      %p133 = scmp.eq.s32.totalorder %s29, 0
      %p134 = por %p132, %p133
      %p135 = scmp.ne.s32.totalorder %s123, %s124
      %p136 = scmp.eq.s32.totalorder %s30, 1
      %p137 = por %p135, %p136
      %p139 = scmp.ne.s32.totalorder %s124, %s138
      %p140 = scmp.eq.s32.totalorder %s30, 0
      %p141 = por %p139, %p140
      %s143 = sadd.s32 %s142, 1
      %p146 = scmp.eq.s32.totalorder %s24, 1
      %p147 = scmp.ne.s32.totalorder %s142, %s144
      %p148 = scmp.eq.s32.totalorder %s24, 0
      %p149 = por %p147, %p148
      %p150 = scmp.ne.s32.totalorder %s142, %s144
      %p151 = scmp.eq.s32.totalorder %s29, 1
      %p152 = por %p150, %p151
      %p153 = scmp.ne.s32.totalorder %s144, %s145
      %p154 = scmp.eq.s32.totalorder %s29, 0
      %p155 = por %p153, %p154
      %p156 = scmp.ne.s32.totalorder %s144, %s145
      %p157 = scmp.eq.s32.totalorder %s30, 1
      %p158 = por %p156, %p157
      %p160 = scmp.ne.s32.totalorder %s145, %s159
      %p161 = scmp.eq.s32.totalorder %s30, 0
      %p162 = por %p160, %p161
      %s164 = sadd.s32 %s163, 1
      %p167 = scmp.eq.s32.totalorder %s24, 1
      %p168 = scmp.ne.s32.totalorder %s163, %s165
      %p169 = scmp.eq.s32.totalorder %s24, 0
      %p170 = por %p168, %p169
      %p171 = scmp.ne.s32.totalorder %s163, %s165
      %p172 = scmp.eq.s32.totalorder %s29, 1
      %p173 = por %p171, %p172
      %p174 = scmp.ne.s32.totalorder %s165, %s166
      %p175 = scmp.eq.s32.totalorder %s29, 0
      %p176 = por %p174, %p175
      %p177 = scmp.ne.s32.totalorder %s165, %s166
      %p178 = scmp.eq.s32.totalorder %s30, 1
      %p179 = por %p177, %p178
      %p181 = scmp.ne.s32.totalorder %s166, %s180
      %p182 = scmp.eq.s32.totalorder %s30, 0
      %p183 = por %p181, %p182
      %s184 = ssub.s32 %s24, %s31
      %p185 = scmp.eq.s32.totalorder %s184, 0
      %s187 = sadd.s32 %s186, 1
      %s188 = scalar_select %p185, %s186, %s187
      %p191 = pneg %p185
      %p192 = scmp.eq.s32.totalorder %s24, 1
      %p193 = por %p191, %p192
      %p194 = scmp.ne.s32.totalorder %s186, %s189
      %p195 = scmp.eq.s32.totalorder %s24, 0
      %p196 = por %p194, %p195
      %p197 = scmp.ne.s32.totalorder %s186, %s189
      %p198 = scmp.eq.s32.totalorder %s29, 1
      %p199 = por %p197, %p198
      %p200 = scmp.ne.s32.totalorder %s189, %s190
      %p201 = scmp.eq.s32.totalorder %s29, 0
      %p202 = por %p200, %p201
      %p203 = scmp.ne.s32.totalorder %s189, %s190
      %p204 = scmp.eq.s32.totalorder %s30, 1
      %p205 = por %p203, %p204
      %p207 = scmp.ne.s32.totalorder %s190, %s206
      %p208 = scmp.eq.s32.totalorder %s30, 0
      %p209 = por %p207, %p208
      %s210 = ssub.s32 %s24, %s31
      %p211 = scmp.eq.s32.totalorder %s210, 0
      %s213 = sadd.s32 %s212, 1
      %s214 = scalar_select %p211, %s212, %s213
      %p217 = pneg %p211
      %p218 = scmp.eq.s32.totalorder %s24, 1
      %p219 = por %p217, %p218
      %p220 = scmp.ne.s32.totalorder %s212, %s215
      %p221 = scmp.eq.s32.totalorder %s24, 0
      %p222 = por %p220, %p221
      %p223 = scmp.ne.s32.totalorder %s212, %s215
      %p224 = scmp.eq.s32.totalorder %s29, 1
      %p225 = por %p223, %p224
      %p226 = scmp.ne.s32.totalorder %s215, %s216
      %p227 = scmp.eq.s32.totalorder %s29, 0
      %p228 = por %p226, %p227
      %p229 = scmp.ne.s32.totalorder %s215, %s216
      %p230 = scmp.eq.s32.totalorder %s30, 1
      %p231 = por %p229, %p230
      %p233 = scmp.ne.s32.totalorder %s216, %s232
      %p234 = scmp.eq.s32.totalorder %s30, 0
      %p235 = por %p233, %p234
      %p236 = scmp.le.s32.totalorder 1, %s24
      %p237 = scmp.lt.s32.totalorder %s24, 3
      %p238 = pnand %p236, %p237
      %p239 = pneg %p238
      // Predicated region
      $region9: #{tpu_custom_call.1} parent=5 // pred_check
        _
      $region10: #{tpu_custom_call.1} parent=5 // pred_check_branch
        %241 = sbr.rel (%p238) target = $region12
      $region11: #{tpu_custom_call.1} parent=5 // pred_region
        %s242 = ssub.s32 %s24, 1
        // Predicated region
        $region13: #{tpu_custom_call.1} parent=11 // pred_check
          %p243 = pneg %p71
        $region14: #{tpu_custom_call.1} parent=11 // pred_check_branch
          %245 = sbr.rel (%p243) target = $region16
        $region15: #{tpu_custom_call.1} parent=11 // pred_region
          %s247 = ssub.s32 256, 256
          %248 = vsyncadd [#allocation6], %s247
          %s249 = sshll.u32 [#allocation5], 4
          %s250 = int_to_ptr.vmem [resolvable:$true] %s249
          %255 = dma.hbm_to_vmem [thread:$0]  %s1, 256, %s250, [#allocation6], 64, 64, 4
        $region16: #{tpu_custom_call.1} parent=11 // pred_fallthru
          _
        // Predicated region
        $region17: #{tpu_custom_call.1} parent=11 // pred_check
          %p256 = pneg %p92
        $region18: #{tpu_custom_call.1} parent=11 // pred_check_branch
          %258 = sbr.rel (%p256) target = $region20
        $region19: #{tpu_custom_call.1} parent=11 // pred_region
          _
        $region20: #{tpu_custom_call.1} parent=11 // pred_fallthru
          _
        // Predicated region
        $region21: #{tpu_custom_call.1} parent=11 // pred_check
          %p259 = pneg %p113
        $region22: #{tpu_custom_call.1} parent=11 // pred_check_branch
          %261 = sbr.rel (%p259) target = $region24
        $region23: #{tpu_custom_call.1} parent=11 // pred_region
          %s263 = ssub.s32 256, 256
          %264 = vsyncadd [#allocation6], %s263
          %s265 = sshll.u32 [#allocation7], 4
          %s266 = int_to_ptr.vmem [resolvable:$true] %s265
          %271 = dma.hbm_to_vmem [thread:$0]  %s3, 256, %s266, [#allocation6], 64, 64, 4
        $region24: #{tpu_custom_call.1} parent=11 // pred_fallthru
          _
        // Predicated region
        $region25: #{tpu_custom_call.1} parent=11 // pred_check
          %p272 = pneg %p134
        $region26: #{tpu_custom_call.1} parent=11 // pred_check_branch
          %274 = sbr.rel (%p272) target = $region28
        $region27: #{tpu_custom_call.1} parent=11 // pred_region
          _
        $region28: #{tpu_custom_call.1} parent=11 // pred_fallthru
          _
        // Predicated region
        $region29: #{tpu_custom_call.1} parent=11 // pred_check
          %p275 = pneg %p155
        $region30: #{tpu_custom_call.1} parent=11 // pred_check_branch
          %277 = sbr.rel (%p275) target = $region32
        $region31: #{tpu_custom_call.1} parent=11 // pred_region
          _
        $region32: #{tpu_custom_call.1} parent=11 // pred_fallthru
          _
        // Predicated region
        $region33: #{tpu_custom_call.1} parent=11 // pred_check
          %p278 = pneg %p176
        $region34: #{tpu_custom_call.1} parent=11 // pred_check_branch
          %280 = sbr.rel (%p278) target = $region36
        $region35: #{tpu_custom_call.1} parent=11 // pred_region
          _
        $region36: #{tpu_custom_call.1} parent=11 // pred_fallthru
          _
      $region12: #{tpu_custom_call.1} parent=5 // pred_fallthru
        _
      %p281 = scmp.lt.s32.totalorder %s24, 2
      // Predicated region
      $region37: #{tpu_custom_call.1} parent=5 // pred_check
        %p282 = pneg %p281
      $region38: #{tpu_custom_call.1} parent=5 // pred_check_branch
        %284 = sbr.rel (%p282) target = $region40
      $region39: #{tpu_custom_call.1} parent=5 // pred_region
        // Predicated region
        $region41: #{tpu_custom_call.1} parent=39 // pred_check
          %p285 = pneg %p44
        $region42: #{tpu_custom_call.1} parent=39 // pred_check_branch
          %287 = sbr.rel (%p285) target = $region44
        $region43: #{tpu_custom_call.1} parent=39 // pred_region
          %s288 = sand.u32 %s34, 1
          %s289 = scalar_lea.sflag [#allocation3], %s288
          %s290 = sand.u32 %s34, 1
          %s291 = smul.addr %s290, 8
          %s292 = scalar_lea.vmem [#allocation2], %s291
          %s294 = ssub.s32 128, 128
          %295 = vsyncadd %s289, %s294
          %s296 = smul.addr %s24, 128
          %s297 = scalar_lea.hbm %s0, %s296
          %s299 = sshll.u32 %s292, 4
          %s300 = int_to_ptr.vmem [resolvable:$true] %s299
          %302 = dma.hbm_to_vmem [thread:$0]  %s297, 128, %s300, %s289
        $region44: #{tpu_custom_call.1} parent=39 // pred_fallthru
          _
        // Predicated region
        $region45: #{tpu_custom_call.1} parent=39 // pred_check
          %p303 = pneg %p196
        $region46: #{tpu_custom_call.1} parent=39 // pred_check_branch
          %305 = sbr.rel (%p303) target = $region48
        $region47: #{tpu_custom_call.1} parent=39 // pred_region
          %s306 = sand.u32 %s186, 1
          %s307 = scalar_lea.sflag [#allocation9], %s306
          %s308 = sand.u32 %s186, 1
          %s309 = smul.addr %s308, 8
          %s310 = scalar_lea.vmem [#allocation8], %s309
          %s312 = ssub.s32 128, 128
          %313 = vsyncadd %s307, %s312
          %s314 = smul.addr %s24, 128
          %s315 = scalar_lea.hbm %s7, %s314
          %s317 = sshll.u32 %s310, 4
          %s318 = int_to_ptr.vmem [resolvable:$true] %s317
          %320 = dma.hbm_to_vmem [thread:$0]  %s315, 128, %s318, %s307
        $region48: #{tpu_custom_call.1} parent=39 // pred_fallthru
          _
      $region40: #{tpu_custom_call.1} parent=5 // pred_fallthru
        _
      %p321 = scmp.le.s32.totalorder 1, %s24
      %p322 = scmp.lt.s32.totalorder %s24, 3
      %p323 = pnand %p321, %p322
      %p324 = pneg %p323
      // Predicated region
      $region49: #{tpu_custom_call.1} parent=5 // pred_check
        _
      $region50: #{tpu_custom_call.1} parent=5 // pred_check_branch
        %326 = sbr.rel (%p323) target = $region52
      $region51: #{tpu_custom_call.1} parent=5 // pred_region
        %s327 = ssub.s32 %s24, 1
        %s328 = sand.u32 %s37, 1
        %s329 = scalar_lea.sflag [#allocation3], %s328
        %s330 = sand.u32 %s37, 1
        %s331 = smul.addr %s330, 8
        %s332 = scalar_lea.vmem [#allocation2], %s331
        // Predicated region
        $region53: #{tpu_custom_call.1} parent=51 // pred_check
          %p333 = pneg %p50
        $region54: #{tpu_custom_call.1} parent=51 // pred_check_branch
          %335 = sbr.rel (%p333) target = $region56
        $region55: #{tpu_custom_call.1} parent=51 // pred_region
          %336 = dma.done %s329, 128
        $region56: #{tpu_custom_call.1} parent=51 // pred_fallthru
          _
        // Predicated region
        $region57: #{tpu_custom_call.1} parent=51 // pred_check
          %p337 = pneg %p71
        $region58: #{tpu_custom_call.1} parent=51 // pred_check_branch
          %339 = sbr.rel (%p337) target = $region60
        $region59: #{tpu_custom_call.1} parent=51 // pred_region
          %340 = dma.done [#allocation6], 256
        $region60: #{tpu_custom_call.1} parent=51 // pred_fallthru
          _
        // Predicated region
        $region61: #{tpu_custom_call.1} parent=51 // pred_check
          %p341 = pneg %p113
        $region62: #{tpu_custom_call.1} parent=51 // pred_check_branch
          %343 = sbr.rel (%p341) target = $region64
        $region63: #{tpu_custom_call.1} parent=51 // pred_region
          %344 = dma.done [#allocation6], 256
        $region64: #{tpu_custom_call.1} parent=51 // pred_fallthru
          _
        %s345 = sand.u32 %s189, 1
        %s346 = scalar_lea.sflag [#allocation9], %s345
        %s347 = sand.u32 %s189, 1
        %s348 = smul.addr %s347, 8
        %s349 = scalar_lea.vmem [#allocation8], %s348
        // Predicated region
        $region65: #{tpu_custom_call.1} parent=51 // pred_check
          %p350 = pneg %p202
        $region66: #{tpu_custom_call.1} parent=51 // pred_check_branch
          %352 = sbr.rel (%p350) target = $region68
        $region67: #{tpu_custom_call.1} parent=51 // pred_region
          %353 = dma.done %s346, 128
        $region68: #{tpu_custom_call.1} parent=51 // pred_fallthru
          _
        %s354 = sand.u32 %s37, 1
        %s355 = scalar_lea.sflag [#allocation3], %s354
        %s356 = sand.u32 %s37, 1
        %s357 = smul.addr %s356, 8
        %s358 = scalar_lea.vmem [#allocation2], %s357
        %p359 = pneg %p50
        %p360 = pneg %p47
        %p361 = pneg %p71
        %p362 = pneg %p68
        %p363 = pneg %p92
        %p364 = pneg %p89
        %p365 = pneg %p113
        %p366 = pneg %p110
        %p367 = pneg %p134
        %p368 = pneg %p131
        %p369 = pneg %p155
        %p370 = pneg %p152
        %p371 = pneg %p176
        %p372 = pneg %p173
        %s373 = sand.u32 %s189, 1
        %s374 = scalar_lea.sflag [#allocation9], %s373
        %s375 = sand.u32 %s189, 1
        %s376 = smul.addr %s375, 8
        %s377 = scalar_lea.vmem [#allocation8], %s376
        %p378 = pneg %p202
        %p379 = pneg %p199
        %p380 = pneg %p228
        %p381 = pneg %p225
        %s382 = sand.u32 %s215, 1
        %s383 = scalar_lea.sflag [#allocation4], %s382
        %s384 = sand.u32 %s215, 1
        %s385 = smul.addr %s384, 8
        %s386 = scalar_lea.vmem [#allocation10], %s385
        %v388 = vld [vmem:[%s332] sm:$0xff]
        %v389 = vld [vmem:[%s5] sm:$0x1]
        %v390 = vld [vmem:[%s6] sm:$0x1]
        %vm391 = vcmask 261120
        %v392 = vsel %vm391, %v388, 0.0
        %393 = vadd.xlane.f32.xlu0 %v392
        %v394 = vpop.xlane.xlu0 %393
        %v395 = vrcp.pop 32.0
        %v396 = vmul.f32 %v394, %v395
        %v397 = vsub.f32 %v388, %v396
        %v398 = vmul.f32 %v397, %v397
        %v399 = vsel %vm391, %v398, 0.0
        %400 = vadd.xlane.f32.xlu0 %v399
        %v401 = vpop.xlane.xlu0 %400
        %v402 = vrcp.pop 31.0
        %v403 = vmul.f32 %v401, %v402
        %v404 = vrsqrt.pop %v403
        %v405 = vmul.f32 %v403, %v404
        %vm406 = vcmp.eq.f32.partialorder %v403, inf
        %v407 = vsel %vm406, %v403, %v405
        %vm408 = vcmp.eq.f32.partialorder %v403, 0.0
        %v409 = vand.u32 %v403, 2147483648
        %v410 = vsel %vm408, %v409, %v407
        %v411 = vadd.f32 %v410, 1e-06
        %v412 = vrcp.pop %v411
        %v414 = vlaneseq
        %v415 = vshrl.u32 %v414, 7
        %v416 = vsub.s32 0, %v415
        %v417 = vrot.slane %v389, %v416
        %v419 = vmul.f32 %v417, %v397
        %v420 = vmul.f32 %v419, %v412
        %v422 = vlaneseq
        %v423 = vshrl.u32 %v422, 7
        %v424 = vsub.s32 0, %v423
        %v425 = vrot.slane %v390, %v424
        %v427 = vadd.f32 %v420, %v425
        %v428 = vpack.c.bf16 %v427, %v427
        %v429 = vld [vmem:[#allocation5] sm:$0xf]
        %v430 = vld [vmem:[#allocation5 + $0x4] sm:$0xf]
        %v431 = vld [vmem:[#allocation5 + $0x8] sm:$0xf]
        %v432 = vld [vmem:[#allocation5 + $0xc] sm:$0xf]
        %v433 = vld [vmem:[%s2] sm:$0x1]
        %v435 = vlaneseq
        %v436 = vshrl.u32 %v435, 7
        %v437 = vsub.s32 0, %v436
        %v438 = vrot.slane %v433, %v437
        %v444 = vunpack.c.l.b16 %v429
        %v445 = vunpack.c.l.b16 %v430
        %v446 = vunpack.c.l.b16 %v431
        %v447 = vunpack.c.l.b16 %v432
        %v448 = vpack.c.b16 %v445, %v444
        %v449 = vpack.c.b16 %v447, %v446
        %v453 = vsel %vm391, %v428, 0
        %455 = vmatprep.subr.bf16.mxu0 0
        %456 = vmatpush1.bf16.msra.mxu0 0
        %457 = vmatprep.subr.bf16.mxu0 0
        %458 = vmatpush1.bf16.msra.mxu0 0
        %459 = vmatprep.subr.bf16.mxu0 0
        %460 = vmatpush1.bf16.msra.mxu0 0
        %461 = vmatprep.subr.bf16.mxu0 0
        %462 = vmatpush1.bf16.msra.mxu0 0
        %463 = vmatprep.subr.bf16.mxu0 0
        %464 = vmatpush1.bf16.msra.mxu0 0
        %465 = vmatprep.subr.bf16.mxu0 0
        %466 = vmatpush1.bf16.msra.mxu0 0
        %467 = vmatprep.subr.bf16.mxu0 0
        %468 = vmatpush1.bf16.msra.mxu0 %v449
        %469 = vmatprep.subr.bf16.mxu0 0
        %470 = vmatpush1.bf16.msra.mxu0 %v448
        %471 = vmatprep.subr.bf16.mxu0 0
        %472 = vmatpush2.bf16.msra.mxu0 0
        %473 = vmatprep.subr.bf16.mxu0 0
        %474 = vmatpush2.bf16.msra.mxu0 0
        %475 = vmatprep.subr.bf16.mxu0 0
        %476 = vmatpush2.bf16.msra.mxu0 0
        %477 = vmatprep.subr.bf16.mxu0 0
        %478 = vmatpush2.bf16.msra.mxu0 0
        %479 = vmatprep.subr.bf16.mxu0 0
        %480 = vmatpush2.bf16.msra.mxu0 0
        %481 = vmatprep.subr.bf16.mxu0 0
        %482 = vmatpush2.bf16.msra.mxu0 0
        %483 = vmatprep.subr.bf16.mxu0 0
        %484 = vmatpush2.bf16.msra.mxu0 0
        %485 = vmatprep.subr.bf16.mxu0 0
        %486 = vmatpush2.bf16.msra.mxu0 0
        %487 = vmatprep.mubr.bf16.mxu0 0
        %488 = vmatmul.mubr.bf16.gmra.mxu0 %v453
        %v489 = vpop.f32.mrf.mxu0
        %v490 = vadd.f32 %v438, %v489
        %v491 = vpop.f32.mrf.mxu0
        %v492 = vpop.f32.mrf.mxu0
        %v493 = vpop.f32.mrf.mxu0
        %494 = vdwg.mxu0
        %v495 = vld [vmem:[%s349] sm:$0xff]
        %v496 = vpack.c.bf16 %v490, %v490
        %498 = vrot.lane.b32.xlu0 %v496, 96
        %v499 = vpop.permute.xlu0 %498
        %vm500 = vcmask 64512
        %v502 = vsel %vm500, %v496, 0
        %v505 = vsel %vm500, %v499, 0
        %507 = vmatprep.subr.bf16.mxu0 0
        %508 = vmatpush1.bf16.xpose.msra.mxu0 0
        %509 = vmatprep.subr.bf16.mxu0 0
        %510 = vmatpush1.bf16.xpose.msra.mxu0 0
        %511 = vmatprep.subr.bf16.mxu0 0
        %512 = vmatpush1.bf16.xpose.msra.mxu0 0
        %513 = vmatprep.subr.bf16.mxu0 0
        %514 = vmatpush1.bf16.xpose.msra.mxu0 0
        %515 = vmatprep.subr.bf16.mxu0 0
        %516 = vmatpush1.bf16.xpose.msra.mxu0 0
        %517 = vmatprep.subr.bf16.mxu0 0
        %518 = vmatpush1.bf16.xpose.msra.mxu0 0
        %519 = vmatprep.subr.bf16.mxu0 0
        %520 = vmatpush1.bf16.xpose.msra.mxu0 0
        %521 = vmatprep.subr.bf16.mxu0 0
        %522 = vmatpush1.bf16.xpose.msra.mxu0 %v505
        %523 = vmatprep.subr.bf16.mxu0 0
        %524 = vmatpush2.bf16.xpose.msra.mxu0 0
        %525 = vmatprep.subr.bf16.mxu0 0
        %526 = vmatpush2.bf16.xpose.msra.mxu0 0
        %527 = vmatprep.subr.bf16.mxu0 0
        %528 = vmatpush2.bf16.xpose.msra.mxu0 0
        %529 = vmatprep.subr.bf16.mxu0 0
        %530 = vmatpush2.bf16.xpose.msra.mxu0 0
        %531 = vmatprep.subr.bf16.mxu0 0
        %532 = vmatpush2.bf16.xpose.msra.mxu0 0
        %533 = vmatprep.subr.bf16.mxu0 0
        %534 = vmatpush2.bf16.xpose.msra.mxu0 0
        %535 = vmatprep.subr.bf16.mxu0 0
        %536 = vmatpush2.bf16.xpose.msra.mxu0 0
        %537 = vmatprep.subr.bf16.mxu0 0
        %538 = vmatpush2.bf16.xpose.msra.mxu0 0
        %539 = vmatprep.mubr.bf16.mxu0 0
        %540 = vmatmul.mubr.bf16.gmra.mxu0 %v502
        %v541 = vpop.f32.mrf.mxu0
        %v542 = vadd.f32 0.0, %v541
        %v543 = vpop.f32.mrf.mxu0
        %v544 = vpop.f32.mrf.mxu0
        %v545 = vpop.f32.mrf.mxu0
        %546 = vdwg.mxu0
        %v547 = vmul.f32 %v542, 0.35355338
        %vm548 = vcmp.gt.f32.partialorder %v495, 0.0
        %v549 = vsel %vm548, %v547, -1e+09
        %v550 = vsel %vm500, %v549, -inf
        %551 = vmax.xlane.f32.xlu0 %v550
        %v552 = vpop.xlane.xlu0 %551
        %v553 = vsub.f32 %v549, %v552
        %v554 = vmul.f32 %v553, 1.442695
        %v555 = vpow.pop %v554
        %v556 = vsel %vm500, %v555, 0.0
        %557 = vadd.xlane.f32.xlu0 %v556
        %v558 = vpop.xlane.xlu0 %557
        %v559 = vrcp.pop %v558
        %v560 = vmul.f32 %v555, %v559
        %v561 = vpack.c.bf16 %v560, %v560
        %562 = vrot.lane.b32.xlu0 %v496, 64
        %v563 = vpop.permute.xlu0 %562
        %v565 = vsel %vm500, %v561, 0
        %vm567 = vcmask 1043456
        %v569 = vsel %vm567, %v563, 0
        %571 = vmatprep.subr.bf16.mxu0 0
        %572 = vmatpush1.bf16.msra.mxu0 0
        %573 = vmatprep.subr.bf16.mxu0 0
        %574 = vmatpush1.bf16.msra.mxu0 0
        %575 = vmatprep.subr.bf16.mxu0 0
        %576 = vmatpush1.bf16.msra.mxu0 0
        %577 = vmatprep.subr.bf16.mxu0 0
        %578 = vmatpush1.bf16.msra.mxu0 0
        %579 = vmatprep.subr.bf16.mxu0 0
        %580 = vmatpush1.bf16.msra.mxu0 0
        %581 = vmatprep.subr.bf16.mxu0 0
        %582 = vmatpush1.bf16.msra.mxu0 0
        %583 = vmatprep.subr.bf16.mxu0 0
        %584 = vmatpush1.bf16.msra.mxu0 0
        %585 = vmatprep.subr.bf16.mxu0 0
        %586 = vmatpush1.bf16.msra.mxu0 %v569
        %587 = vmatprep.subr.bf16.mxu0 0
        %588 = vmatpush2.bf16.msra.mxu0 0
        %589 = vmatprep.subr.bf16.mxu0 0
        %590 = vmatpush2.bf16.msra.mxu0 0
        %591 = vmatprep.subr.bf16.mxu0 0
        %592 = vmatpush2.bf16.msra.mxu0 0
        %593 = vmatprep.subr.bf16.mxu0 0
        %594 = vmatpush2.bf16.msra.mxu0 0
        %595 = vmatprep.subr.bf16.mxu0 0
        %596 = vmatpush2.bf16.msra.mxu0 0
        %597 = vmatprep.subr.bf16.mxu0 0
        %598 = vmatpush2.bf16.msra.mxu0 0
        %599 = vmatprep.subr.bf16.mxu0 0
        %600 = vmatpush2.bf16.msra.mxu0 0
        %601 = vmatprep.subr.bf16.mxu0 0
        %602 = vmatpush2.bf16.msra.mxu0 0
        %603 = vmatprep.mubr.bf16.mxu0 0
        %604 = vmatmul.mubr.bf16.gmra.mxu0 %v565
        %v605 = vpop.f32.mrf.mxu0
        %v606 = vadd.f32 0.0, %v605
        %v607 = vpop.f32.mrf.mxu0
        %v608 = vpop.f32.mrf.mxu0
        %v609 = vpop.f32.mrf.mxu0
        %610 = vdwg.mxu0
        %611 = vrot.lane.b32.xlu0 %v496, 120
        %v612 = vpop.permute.xlu0 %611
        %613 = vrot.lane.b32.xlu0 %v496, 88
        %v614 = vpop.permute.xlu0 %613
        %v616 = vsel %vm500, %v612, 0
        %v619 = vsel %vm500, %v614, 0
        %621 = vmatprep.subr.bf16.mxu0 0
        %622 = vmatpush1.bf16.xpose.msra.mxu0 0
        %623 = vmatprep.subr.bf16.mxu0 0
        %624 = vmatpush1.bf16.xpose.msra.mxu0 0
        %625 = vmatprep.subr.bf16.mxu0 0
        %626 = vmatpush1.bf16.xpose.msra.mxu0 0
        %627 = vmatprep.subr.bf16.mxu0 0
        %628 = vmatpush1.bf16.xpose.msra.mxu0 0
        %629 = vmatprep.subr.bf16.mxu0 0
        %630 = vmatpush1.bf16.xpose.msra.mxu0 0
        %631 = vmatprep.subr.bf16.mxu0 0
        %632 = vmatpush1.bf16.xpose.msra.mxu0 0
        %633 = vmatprep.subr.bf16.mxu0 0
        %634 = vmatpush1.bf16.xpose.msra.mxu0 0
        %635 = vmatprep.subr.bf16.mxu0 0
        %636 = vmatpush1.bf16.xpose.msra.mxu0 %v619
        %637 = vmatprep.subr.bf16.mxu0 0
        %638 = vmatpush2.bf16.xpose.msra.mxu0 0
        %639 = vmatprep.subr.bf16.mxu0 0
        %640 = vmatpush2.bf16.xpose.msra.mxu0 0
        %641 = vmatprep.subr.bf16.mxu0 0
        %642 = vmatpush2.bf16.xpose.msra.mxu0 0
        %643 = vmatprep.subr.bf16.mxu0 0
        %644 = vmatpush2.bf16.xpose.msra.mxu0 0
        %645 = vmatprep.subr.bf16.mxu0 0
        %646 = vmatpush2.bf16.xpose.msra.mxu0 0
        %647 = vmatprep.subr.bf16.mxu0 0
        %648 = vmatpush2.bf16.xpose.msra.mxu0 0
        %649 = vmatprep.subr.bf16.mxu0 0
        %650 = vmatpush2.bf16.xpose.msra.mxu0 0
        %651 = vmatprep.subr.bf16.mxu0 0
        %652 = vmatpush2.bf16.xpose.msra.mxu0 0
        %653 = vmatprep.mubr.bf16.mxu0 0
        %654 = vmatmul.mubr.bf16.gmra.mxu0 %v616
        %v655 = vpop.f32.mrf.mxu0
        %v656 = vadd.f32 0.0, %v655
        %v657 = vpop.f32.mrf.mxu0
        %v658 = vpop.f32.mrf.mxu0
        %v659 = vpop.f32.mrf.mxu0
        %660 = vdwg.mxu0
        %v661 = vmul.f32 %v656, 0.35355338
        %v662 = vsel %vm548, %v661, -1e+09
        %v663 = vsel %vm500, %v662, -inf
        %664 = vmax.xlane.f32.xlu0 %v663
        %v665 = vpop.xlane.xlu0 %664
        %v666 = vsub.f32 %v662, %v665
        %v667 = vmul.f32 %v666, 1.442695
        %v668 = vpow.pop %v667
        %v669 = vsel %vm500, %v668, 0.0
        %670 = vadd.xlane.f32.xlu0 %v669
        %v671 = vpop.xlane.xlu0 %670
        %v672 = vrcp.pop %v671
        %v673 = vmul.f32 %v668, %v672
        %v674 = vpack.c.bf16 %v673, %v673
        %675 = vrot.lane.b32.xlu0 %v496, 56
        %v676 = vpop.permute.xlu0 %675
        %v678 = vsel %vm500, %v674, 0
        %v681 = vsel %vm567, %v676, 0
        %683 = vmatprep.subr.bf16.mxu0 0
        %684 = vmatpush1.bf16.msra.mxu0 0
        %685 = vmatprep.subr.bf16.mxu0 0
        %686 = vmatpush1.bf16.msra.mxu0 0
        %687 = vmatprep.subr.bf16.mxu0 0
        %688 = vmatpush1.bf16.msra.mxu0 0
        %689 = vmatprep.subr.bf16.mxu0 0
        %690 = vmatpush1.bf16.msra.mxu0 0
        %691 = vmatprep.subr.bf16.mxu0 0
        %692 = vmatpush1.bf16.msra.mxu0 0
        %693 = vmatprep.subr.bf16.mxu0 0
        %694 = vmatpush1.bf16.msra.mxu0 0
        %695 = vmatprep.subr.bf16.mxu0 0
        %696 = vmatpush1.bf16.msra.mxu0 0
        %697 = vmatprep.subr.bf16.mxu0 0
        %698 = vmatpush1.bf16.msra.mxu0 %v681
        %699 = vmatprep.subr.bf16.mxu0 0
        %700 = vmatpush2.bf16.msra.mxu0 0
        %701 = vmatprep.subr.bf16.mxu0 0
        %702 = vmatpush2.bf16.msra.mxu0 0
        %703 = vmatprep.subr.bf16.mxu0 0
        %704 = vmatpush2.bf16.msra.mxu0 0
        %705 = vmatprep.subr.bf16.mxu0 0
        %706 = vmatpush2.bf16.msra.mxu0 0
        %707 = vmatprep.subr.bf16.mxu0 0
        %708 = vmatpush2.bf16.msra.mxu0 0
        %709 = vmatprep.subr.bf16.mxu0 0
        %710 = vmatpush2.bf16.msra.mxu0 0
        %711 = vmatprep.subr.bf16.mxu0 0
        %712 = vmatpush2.bf16.msra.mxu0 0
        %713 = vmatprep.subr.bf16.mxu0 0
        %714 = vmatpush2.bf16.msra.mxu0 0
        %715 = vmatprep.mubr.bf16.mxu0 0
        %716 = vmatmul.mubr.bf16.gmra.mxu0 %v678
        %v717 = vpop.f32.mrf.mxu0
        %v718 = vadd.f32 0.0, %v717
        %v719 = vpop.f32.mrf.mxu0
        %v720 = vpop.f32.mrf.mxu0
        %v721 = vpop.f32.mrf.mxu0
        %722 = vdwg.mxu0
        %723 = vrot.lane.b32.xlu0 %v496, 112
        %v724 = vpop.permute.xlu0 %723
        %725 = vrot.lane.b32.xlu0 %v496, 80
        %v726 = vpop.permute.xlu0 %725
        %v728 = vsel %vm500, %v724, 0
        %v731 = vsel %vm500, %v726, 0
        %733 = vmatprep.subr.bf16.mxu0 0
        %734 = vmatpush1.bf16.xpose.msra.mxu0 0
        %735 = vmatprep.subr.bf16.mxu0 0
        %736 = vmatpush1.bf16.xpose.msra.mxu0 0
        %737 = vmatprep.subr.bf16.mxu0 0
        %738 = vmatpush1.bf16.xpose.msra.mxu0 0
        %739 = vmatprep.subr.bf16.mxu0 0
        %740 = vmatpush1.bf16.xpose.msra.mxu0 0
        %741 = vmatprep.subr.bf16.mxu0 0
        %742 = vmatpush1.bf16.xpose.msra.mxu0 0
        %743 = vmatprep.subr.bf16.mxu0 0
        %744 = vmatpush1.bf16.xpose.msra.mxu0 0
        %745 = vmatprep.subr.bf16.mxu0 0
        %746 = vmatpush1.bf16.xpose.msra.mxu0 0
        %747 = vmatprep.subr.bf16.mxu0 0
        %748 = vmatpush1.bf16.xpose.msra.mxu0 %v731
        %749 = vmatprep.subr.bf16.mxu0 0
        %750 = vmatpush2.bf16.xpose.msra.mxu0 0
        %751 = vmatprep.subr.bf16.mxu0 0
        %752 = vmatpush2.bf16.xpose.msra.mxu0 0
        %753 = vmatprep.subr.bf16.mxu0 0
        %754 = vmatpush2.bf16.xpose.msra.mxu0 0
        %755 = vmatprep.subr.bf16.mxu0 0
        %756 = vmatpush2.bf16.xpose.msra.mxu0 0
        %757 = vmatprep.subr.bf16.mxu0 0
        %758 = vmatpush2.bf16.xpose.msra.mxu0 0
        %759 = vmatprep.subr.bf16.mxu0 0
        %760 = vmatpush2.bf16.xpose.msra.mxu0 0
        %761 = vmatprep.subr.bf16.mxu0 0
        %762 = vmatpush2.bf16.xpose.msra.mxu0 0
        %763 = vmatprep.subr.bf16.mxu0 0
        %764 = vmatpush2.bf16.xpose.msra.mxu0 0
        %765 = vmatprep.mubr.bf16.mxu0 0
        %766 = vmatmul.mubr.bf16.gmra.mxu0 %v728
        %v767 = vpop.f32.mrf.mxu0
        %v768 = vadd.f32 0.0, %v767
        %v769 = vpop.f32.mrf.mxu0
        %v770 = vpop.f32.mrf.mxu0
        %v771 = vpop.f32.mrf.mxu0
        %772 = vdwg.mxu0
        %v773 = vmul.f32 %v768, 0.35355338
        %v774 = vsel %vm548, %v773, -1e+09
        %v775 = vsel %vm500, %v774, -inf
        %776 = vmax.xlane.f32.xlu0 %v775
        %v777 = vpop.xlane.xlu0 %776
        %v778 = vsub.f32 %v774, %v777
        %v779 = vmul.f32 %v778, 1.442695
        %v780 = vpow.pop %v779
        %v781 = vsel %vm500, %v780, 0.0
        %782 = vadd.xlane.f32.xlu0 %v781
        %v783 = vpop.xlane.xlu0 %782
        %v784 = vrcp.pop %v783
        %v785 = vmul.f32 %v780, %v784
        %v786 = vpack.c.bf16 %v785, %v785
        %787 = vrot.lane.b32.xlu0 %v496, 48
        %v788 = vpop.permute.xlu0 %787
        %v790 = vsel %vm500, %v786, 0
        %v793 = vsel %vm567, %v788, 0
        %795 = vmatprep.subr.bf16.mxu0 0
        %796 = vmatpush1.bf16.msra.mxu0 0
        %797 = vmatprep.subr.bf16.mxu0 0
        %798 = vmatpush1.bf16.msra.mxu0 0
        %799 = vmatprep.subr.bf16.mxu0 0
        %800 = vmatpush1.bf16.msra.mxu0 0
        %801 = vmatprep.subr.bf16.mxu0 0
        %802 = vmatpush1.bf16.msra.mxu0 0
        %803 = vmatprep.subr.bf16.mxu0 0
        %804 = vmatpush1.bf16.msra.mxu0 0
        %805 = vmatprep.subr.bf16.mxu0 0
        %806 = vmatpush1.bf16.msra.mxu0 0
        %807 = vmatprep.subr.bf16.mxu0 0
        %808 = vmatpush1.bf16.msra.mxu0 0
        %809 = vmatprep.subr.bf16.mxu0 0
        %810 = vmatpush1.bf16.msra.mxu0 %v793
        %811 = vmatprep.subr.bf16.mxu0 0
        %812 = vmatpush2.bf16.msra.mxu0 0
        %813 = vmatprep.subr.bf16.mxu0 0
        %814 = vmatpush2.bf16.msra.mxu0 0
        %815 = vmatprep.subr.bf16.mxu0 0
        %816 = vmatpush2.bf16.msra.mxu0 0
        %817 = vmatprep.subr.bf16.mxu0 0
        %818 = vmatpush2.bf16.msra.mxu0 0
        %819 = vmatprep.subr.bf16.mxu0 0
        %820 = vmatpush2.bf16.msra.mxu0 0
        %821 = vmatprep.subr.bf16.mxu0 0
        %822 = vmatpush2.bf16.msra.mxu0 0
        %823 = vmatprep.subr.bf16.mxu0 0
        %824 = vmatpush2.bf16.msra.mxu0 0
        %825 = vmatprep.subr.bf16.mxu0 0
        %826 = vmatpush2.bf16.msra.mxu0 0
        %827 = vmatprep.mubr.bf16.mxu0 0
        %828 = vmatmul.mubr.bf16.gmra.mxu0 %v790
        %v829 = vpop.f32.mrf.mxu0
        %v830 = vadd.f32 0.0, %v829
        %v831 = vpop.f32.mrf.mxu0
        %v832 = vpop.f32.mrf.mxu0
        %v833 = vpop.f32.mrf.mxu0
        %834 = vdwg.mxu0
        %835 = vrot.lane.b32.xlu0 %v496, 104
        %v836 = vpop.permute.xlu0 %835
        %837 = vrot.lane.b32.xlu0 %v496, 72
        %v838 = vpop.permute.xlu0 %837
        %v840 = vsel %vm500, %v836, 0
        %v843 = vsel %vm500, %v838, 0
        %845 = vmatprep.subr.bf16.mxu0 0
        %846 = vmatpush1.bf16.xpose.msra.mxu0 0
        %847 = vmatprep.subr.bf16.mxu0 0
        %848 = vmatpush1.bf16.xpose.msra.mxu0 0
        %849 = vmatprep.subr.bf16.mxu0 0
        %850 = vmatpush1.bf16.xpose.msra.mxu0 0
        %851 = vmatprep.subr.bf16.mxu0 0
        %852 = vmatpush1.bf16.xpose.msra.mxu0 0
        %853 = vmatprep.subr.bf16.mxu0 0
        %854 = vmatpush1.bf16.xpose.msra.mxu0 0
        %855 = vmatprep.subr.bf16.mxu0 0
        %856 = vmatpush1.bf16.xpose.msra.mxu0 0
        %857 = vmatprep.subr.bf16.mxu0 0
        %858 = vmatpush1.bf16.xpose.msra.mxu0 0
        %859 = vmatprep.subr.bf16.mxu0 0
        %860 = vmatpush1.bf16.xpose.msra.mxu0 %v843
        %861 = vmatprep.subr.bf16.mxu0 0
        %862 = vmatpush2.bf16.xpose.msra.mxu0 0
        %863 = vmatprep.subr.bf16.mxu0 0
        %864 = vmatpush2.bf16.xpose.msra.mxu0 0
        %865 = vmatprep.subr.bf16.mxu0 0
        %866 = vmatpush2.bf16.xpose.msra.mxu0 0
        %867 = vmatprep.subr.bf16.mxu0 0
        %868 = vmatpush2.bf16.xpose.msra.mxu0 0
        %869 = vmatprep.subr.bf16.mxu0 0
        %870 = vmatpush2.bf16.xpose.msra.mxu0 0
        %871 = vmatprep.subr.bf16.mxu0 0
        %872 = vmatpush2.bf16.xpose.msra.mxu0 0
        %873 = vmatprep.subr.bf16.mxu0 0
        %874 = vmatpush2.bf16.xpose.msra.mxu0 0
        %875 = vmatprep.subr.bf16.mxu0 0
        %876 = vmatpush2.bf16.xpose.msra.mxu0 0
        %877 = vmatprep.mubr.bf16.mxu0 0
        %878 = vmatmul.mubr.bf16.gmra.mxu0 %v840
        %v879 = vpop.f32.mrf.mxu0
        %v880 = vadd.f32 0.0, %v879
        %v881 = vpop.f32.mrf.mxu0
        %v882 = vpop.f32.mrf.mxu0
        %v883 = vpop.f32.mrf.mxu0
        %884 = vdwg.mxu0
        %v885 = vmul.f32 %v880, 0.35355338
        %v886 = vsel %vm548, %v885, -1e+09
        %v887 = vsel %vm500, %v886, -inf
        %888 = vmax.xlane.f32.xlu0 %v887
        %v889 = vpop.xlane.xlu0 %888
        %v890 = vsub.f32 %v886, %v889
        %v891 = vmul.f32 %v890, 1.442695
        %v892 = vpow.pop %v891
        %v893 = vsel %vm500, %v892, 0.0
        %894 = vadd.xlane.f32.xlu0 %v893
        %v895 = vpop.xlane.xlu0 %894
        %v896 = vrcp.pop %v895
        %v897 = vmul.f32 %v892, %v896
        %v898 = vpack.c.bf16 %v897, %v897
        %899 = vrot.lane.b32.xlu0 %v496, 40
        %v900 = vpop.permute.xlu0 %899
        %v902 = vsel %vm500, %v898, 0
        %v905 = vsel %vm567, %v900, 0
        %907 = vmatprep.subr.bf16.mxu0 0
        %908 = vmatpush1.bf16.msra.mxu0 0
        %909 = vmatprep.subr.bf16.mxu0 0
        %910 = vmatpush1.bf16.msra.mxu0 0
        %911 = vmatprep.subr.bf16.mxu0 0
        %912 = vmatpush1.bf16.msra.mxu0 0
        %913 = vmatprep.subr.bf16.mxu0 0
        %914 = vmatpush1.bf16.msra.mxu0 0
        %915 = vmatprep.subr.bf16.mxu0 0
        %916 = vmatpush1.bf16.msra.mxu0 0
        %917 = vmatprep.subr.bf16.mxu0 0
        %918 = vmatpush1.bf16.msra.mxu0 0
        %919 = vmatprep.subr.bf16.mxu0 0
        %920 = vmatpush1.bf16.msra.mxu0 0
        %921 = vmatprep.subr.bf16.mxu0 0
        %922 = vmatpush1.bf16.msra.mxu0 %v905
        %923 = vmatprep.subr.bf16.mxu0 0
        %924 = vmatpush2.bf16.msra.mxu0 0
        %925 = vmatprep.subr.bf16.mxu0 0
        %926 = vmatpush2.bf16.msra.mxu0 0
        %927 = vmatprep.subr.bf16.mxu0 0
        %928 = vmatpush2.bf16.msra.mxu0 0
        %929 = vmatprep.subr.bf16.mxu0 0
        %930 = vmatpush2.bf16.msra.mxu0 0
        %931 = vmatprep.subr.bf16.mxu0 0
        %932 = vmatpush2.bf16.msra.mxu0 0
        %933 = vmatprep.subr.bf16.mxu0 0
        %934 = vmatpush2.bf16.msra.mxu0 0
        %935 = vmatprep.subr.bf16.mxu0 0
        %936 = vmatpush2.bf16.msra.mxu0 0
        %937 = vmatprep.subr.bf16.mxu0 0
        %938 = vmatpush2.bf16.msra.mxu0 0
        %939 = vmatprep.mubr.bf16.mxu0 0
        %940 = vmatmul.mubr.bf16.gmra.mxu0 %v902
        %v941 = vpop.f32.mrf.mxu0
        %v942 = vadd.f32 0.0, %v941
        %v943 = vpop.f32.mrf.mxu0
        %v944 = vpop.f32.mrf.mxu0
        %v945 = vpop.f32.mrf.mxu0
        %946 = vdwg.mxu0
        %948 = vrot.lane.b32.xlu0 %v718, 8
        %v949 = vpop.permute.xlu0 %948
        %952 = vrot.lane.b32.xlu0 %v830, 16
        %v953 = vpop.permute.xlu0 %952
        %956 = vrot.lane.b32.xlu0 %v942, 24
        %v957 = vpop.permute.xlu0 %956
        %v959 = vsel %vm500, %v606, %v949
        %vm960 = vcmask 130048
        %v961 = vsel %vm960, %v959, %v953
        %vm962 = vcmask 195584
        %v963 = vsel %vm962, %v961, %v957
        %v964 = vpack.c.bf16 %v963, %v963
        %v965 = vld [vmem:[#allocation7] sm:$0xf]
        %v966 = vld [vmem:[#allocation7 + $0x4] sm:$0xf]
        %v967 = vld [vmem:[#allocation7 + $0x8] sm:$0xf]
        %v968 = vld [vmem:[#allocation7 + $0xc] sm:$0xf]
        %v969 = vld [vmem:[%s4] sm:$0x1]
        %v971 = vlaneseq
        %v972 = vshrl.u32 %v971, 7
        %v973 = vsub.s32 0, %v972
        %v974 = vrot.slane %v969, %v973
        %v980 = vunpack.c.l.b16 %v965
        %v981 = vunpack.c.l.b16 %v966
        %v982 = vunpack.c.l.b16 %v967
        %v983 = vunpack.c.l.b16 %v968
        %v984 = vpack.c.b16 %v981, %v980
        %v985 = vpack.c.b16 %v983, %v982
        %v989 = vsel %vm391, %v964, 0
        %991 = vmatprep.subr.bf16.mxu0 0
        %992 = vmatpush1.bf16.msra.mxu0 0
        %993 = vmatprep.subr.bf16.mxu0 0
        %994 = vmatpush1.bf16.msra.mxu0 0
        %995 = vmatprep.subr.bf16.mxu0 0
        %996 = vmatpush1.bf16.msra.mxu0 0
        %997 = vmatprep.subr.bf16.mxu0 0
        %998 = vmatpush1.bf16.msra.mxu0 0
        %999 = vmatprep.subr.bf16.mxu0 0
        %1000 = vmatpush1.bf16.msra.mxu0 0
        %1001 = vmatprep.subr.bf16.mxu0 0
        %1002 = vmatpush1.bf16.msra.mxu0 0
        %1003 = vmatprep.subr.bf16.mxu0 0
        %1004 = vmatpush1.bf16.msra.mxu0 %v985
        %1005 = vmatprep.subr.bf16.mxu0 0
        %1006 = vmatpush1.bf16.msra.mxu0 %v984
        %1007 = vmatprep.subr.bf16.mxu0 0
        %1008 = vmatpush2.bf16.msra.mxu0 0
        %1009 = vmatprep.subr.bf16.mxu0 0
        %1010 = vmatpush2.bf16.msra.mxu0 0
        %1011 = vmatprep.subr.bf16.mxu0 0
        %1012 = vmatpush2.bf16.msra.mxu0 0
        %1013 = vmatprep.subr.bf16.mxu0 0
        %1014 = vmatpush2.bf16.msra.mxu0 0
        %1015 = vmatprep.subr.bf16.mxu0 0
        %1016 = vmatpush2.bf16.msra.mxu0 0
        %1017 = vmatprep.subr.bf16.mxu0 0
        %1018 = vmatpush2.bf16.msra.mxu0 0
        %1019 = vmatprep.subr.bf16.mxu0 0
        %1020 = vmatpush2.bf16.msra.mxu0 0
        %1021 = vmatprep.subr.bf16.mxu0 0
        %1022 = vmatpush2.bf16.msra.mxu0 0
        %1023 = vmatprep.mubr.bf16.mxu0 0
        %1024 = vmatmul.mubr.bf16.gmra.mxu0 %v989
        %v1025 = vpop.f32.mrf.mxu0
        %v1026 = vadd.f32 %v974, %v1025
        %v1027 = vpop.f32.mrf.mxu0
        %v1028 = vpop.f32.mrf.mxu0
        %v1029 = vpop.f32.mrf.mxu0
        %1030 = vdwg.mxu0
        %v1031 = vadd.f32 %v1026, %v388
        %1032 = vst.msk [vmem:[%s386] sm:$0xff] %vm391, %v1031
        %s1033 = sand.u32 %s215, 1
        %s1034 = scalar_lea.sflag [#allocation4], %s1033
        %s1035 = sand.u32 %s215, 1
        %s1036 = smul.addr %s1035, 8
        %s1037 = scalar_lea.vmem [#allocation10], %s1036
        // Predicated region
        $region69: #{tpu_custom_call.1} parent=51 // pred_check
          %p1038 = pneg %p225
        $region70: #{tpu_custom_call.1} parent=51 // pred_check_branch
          %1040 = sbr.rel (%p1038) target = $region72
        $region71: #{tpu_custom_call.1} parent=51 // pred_region
          %s1042 = ssub.s32 128, 128
          %1043 = vsyncadd %s1034, %s1042
          %s1044 = smul.addr %s29, 128
          %s1045 = scalar_lea.hbm %s8, %s1044
          %s1047 = sshll.u32 %s1037, 4
          %s1048 = int_to_ptr.vmem [resolvable:$true] %s1047
          %1050 = dma.vmem_to_hbm [thread:$0]  %s1048, 128, %s1045, %s1034
        $region72: #{tpu_custom_call.1} parent=51 // pred_fallthru
          _
      $region52: #{tpu_custom_call.1} parent=5 // pred_fallthru
        _
      %p1051 = scmp.le.s32.totalorder 2, %s24
      // Predicated region
      $region73: #{tpu_custom_call.1} parent=5 // pred_check
        %p1052 = pneg %p1051
      $region74: #{tpu_custom_call.1} parent=5 // pred_check_branch
        %1054 = sbr.rel (%p1052) target = $region76
      $region75: #{tpu_custom_call.1} parent=5 // pred_region
        %s1055 = ssub.s32 %s24, 2
        // Predicated region
        $region77: #{tpu_custom_call.1} parent=75 // pred_check
          %p1056 = pneg %p231
        $region78: #{tpu_custom_call.1} parent=75 // pred_check_branch
          %1058 = sbr.rel (%p1056) target = $region80
        $region79: #{tpu_custom_call.1} parent=75 // pred_region
          %s1059 = sand.u32 %s216, 1
          %s1060 = scalar_lea.sflag [#allocation4], %s1059
          %s1061 = sand.u32 %s216, 1
          %s1062 = smul.addr %s1061, 8
          %s1063 = scalar_lea.vmem [#allocation10], %s1062
          %1064 = dma.done %s1060, 128
        $region80: #{tpu_custom_call.1} parent=75 // pred_fallthru
          _
      $region76: #{tpu_custom_call.1} parent=5 // pred_fallthru
        _
    $region6: #{tpu_custom_call.1} parent=1 // loop_footer
      %s28 = sadd.s32 1, %s24
    $region7: #{tpu_custom_call.1} parent=1 // loop_footer_branch
      %23 = sbr.rel target = $region3
    $region8: #{tpu_custom_call.1} parent=1 // loop_exit
      _
    %1065 = vsyncpa [#allocation3], 1
    %s1066 = scalar_lea.sflag [#allocation3], 1
    %1067 = vsyncpa %s1066, 1
    %1068 = vsyncpa [#allocation6], 1
    %1069 = vsyncpa [#allocation9], 1
    %s1070 = scalar_lea.sflag [#allocation9], 1
    %1071 = vsyncpa %s1070, 1
    %1072 = vsyncpa [#allocation4], 1
    %s1073 = scalar_lea.sflag [#allocation4], 1
    %1074 = vsyncpa %s1073, 1

</llo_original>
